<compile_context>
chip_gen: v7x
topology: tpu7x:2x2x1
jax: 0.10.0
libtpu: 0.0.40
codegen_flags: <defaults>
</compile_context>

<pallas_src>
import functools

import jax
import jax.numpy as jnp
from jax.experimental import pallas as pl
from jax.experimental.pallas import tpu as pltpu

D_IN, H1, H2, D_OUT = 784, 512, 256, 1


def _leaky_relu(x, slope=0.2):
    return jnp.where(x > 0, x, slope * x)


def _sigmoid(x):
    return 1.0 / (1.0 + jnp.exp(-x))


def _round_up(n, m):
    return ((n + m - 1) // m) * m


def discriminator_kernel(x_ref, w1_ref, b1_ref, w2_ref, b2_ref, w3_ref, b3_ref,
                         o_ref):
    """Fused MLP: two bf16 MXU matmuls (f32 acc) + VPU layer 3 + sigmoid."""
    # Cast the input tile to bf16 in-register (no separate XLA cast pass).
    x = x_ref[...].astype(jnp.bfloat16)                        # (TB, 784)

    h = jnp.dot(x, w1_ref[...], preferred_element_type=jnp.float32)
    h = _leaky_relu(h + b1_ref[...])                           # (TB, 512) f32

    h = jnp.dot(h.astype(jnp.bfloat16), w2_ref[...],
                preferred_element_type=jnp.float32)
    h = _leaky_relu(h + b2_ref[...])                           # (TB, 256) f32

    # Layer 3 (256 -> 1): a single real output column, so use the VPU
    # (broadcast multiply) + XLU (lane reduce) instead of a 256x128 padded
    # MXU matmul and a 128x-padded output store.
    logit = jnp.sum(h * w3_ref[...], axis=-1, keepdims=True)   # (TB, 1) f32
    logit = logit + b3_ref[...]

    o_ref[...] = _sigmoid(logit).astype(o_ref.dtype)


@functools.partial(jax.jit, static_argnames=("batch_tile",))
def discriminator_forward(x, packed_params, batch_tile=1024):
    """x: (B, 784) float32/bfloat16 -> (B, 1) float32 probabilities.

    batch_tile (static): rows per grid step.  512-1024 keeps the ~0.35 us
    per-grid-step overhead negligible on v6e/v7x while total VMEM stays well
    under 32 MiB; on v7x prefer batches that give >= 2 grid steps so both
    TensorCores get work.  The wrapper shrinks the tile for small batches and
    zero-pads the batch only when it is not a multiple of the tile (padded
    rows produce sigmoid(bias) values that are sliced off).
    """
    assert batch_tile >= 8 and batch_tile % 8 == 0, batch_tile
    w1, b1, w2, b2, w3_row, b3 = packed_params

    if x.ndim > 2:                       # accept (B, 1, 28, 28) images too
        x = x.reshape(x.shape[0], -1)
    B = x.shape[0]

    tile = min(batch_tile, _round_up(B, 8))
    B_pad = _round_up(B, tile)
    if B_pad != B:
        x = jnp.pad(x, ((0, B_pad - B), (0, 0)))

    # Small constant operands: whole-array, single-copy, VMEM-resident
    # (no per-step DMA / double-buffering of ~1 MiB of weights).
    vmem_whole = pl.BlockSpec(memory_space=pltpu.MemorySpace.VMEM)

    out = pl.pallas_call(
        discriminator_kernel,
        out_shape=jax.ShapeDtypeStruct((B_pad, D_OUT), jnp.float32),
        grid_spec=pltpu.PrefetchScalarGridSpec(
            num_scalar_prefetch=0,
            grid=(B_pad // tile,),
            in_specs=[
                pl.BlockSpec((tile, D_IN), lambda i: (i, 0)),  # x tile
                vmem_whole,   # w1 (784, 512) bf16
                vmem_whole,   # b1 (1, 512)   f32
                vmem_whole,   # w2 (512, 256) bf16
                vmem_whole,   # b2 (1, 256)   f32
                vmem_whole,   # w3 (1, 256)   f32  (row vector of the 256->1 layer)
                vmem_whole,   # b3 (1, 1)     f32
            ],
            out_specs=pl.BlockSpec((tile, D_OUT), lambda i: (i, 0)),
        ),
        compiler_params=pltpu.CompilerParams(
            dimension_semantics=("parallel",),
            vmem_limit_bytes=32 * 1024 * 1024,
        ),
    )(x, w1, b1, w2, b2, w3_row, b3)

    return out if B_pad == B else out[:B]


def init_params(key):
    """Deterministic init mimicking PyTorch Linear's U(-1/sqrt(fan_in), ...)."""
    ks = jax.random.split(key, 6)

    def linear(kw, kb, fan_in, fan_out):
        bound = 1.0 / jnp.sqrt(fan_in)
        w = jax.random.uniform(kw, (fan_in, fan_out), jnp.float32, -bound, bound)
        b = jax.random.uniform(kb, (1, fan_out), jnp.float32, -bound, bound)
        return w, b

    w1, b1 = linear(ks[0], ks[1], D_IN, H1)
    w2, b2 = linear(ks[2], ks[3], H1, H2)
    w3, b3 = linear(ks[4], ks[5], H2, D_OUT)
    return (w1, b1, w2, b2, w3, b3)


def pack_params(params):
    """f32 params -> kernel layout: bf16 matmul weights, f32 biases,
    layer-3 weight as a (1, 256) f32 row vector (used on the VPU)."""
    w1, b1, w2, b2, w3, b3 = params
    return (w1.astype(jnp.bfloat16), b1,
            w2.astype(jnp.bfloat16), b2,
            w3.T,                       # (1, 256) f32
            b3)                         # (1, 1)   f32


def reference_forward(x, packed_params):
    """Pure-JAX reference mirroring the kernel's bf16 rounding points."""
    w1, b1, w2, b2, w3_row, b3 = packed_params
    xr = x.astype(jnp.bfloat16).astype(jnp.float32)
    h = _leaky_relu(xr @ w1.astype(jnp.float32) + b1)
    h = _leaky_relu(h.astype(jnp.bfloat16).astype(jnp.float32)
                    @ w2.astype(jnp.float32) + b2)
    logit = jnp.sum(h * w3_row, axis=-1, keepdims=True) + b3
    return _sigmoid(logit)


if __name__ == "__main__":
    key = jax.random.PRNGKey(0)
    k_params, k_x = jax.random.split(key)

    params = init_params(k_params)
    packed = pack_params(params)

    # Small batch, not a multiple of 8: exercises the zero-pad path.
    batch = 37
    x = jax.random.normal(k_x, (batch, D_IN), jnp.float32)

    out = jax.block_until_ready(discriminator_forward(x, packed))
    ref = reference_forward(x, packed)

    assert out.shape == (batch, D_OUT), out.shape
    assert jnp.allclose(out, ref, atol=2e-2, rtol=2e-2), "mismatch vs. JAX reference"
    assert bool(jnp.all((out >= 0.0) & (out <= 1.0))), "sigmoid range violated"

    # Also exercise a multi-step grid (grid=(3,)) at small shapes.
    out2 = jax.block_until_ready(discriminator_forward(x, packed, batch_tile=16))
    assert out2.shape == (batch, D_OUT), out2.shape
    assert jnp.allclose(out2, ref, atol=2e-2, rtol=2e-2), "mismatch (tiled grid)"

    print("KERNEL_OK")
</pallas_src>

<mosaic_0001>
module attributes {stable_mosaic.version = 11 : i64} {
  func.func @discriminator_kernel(%arg0: i32, %arg1: memref<40x784xf32, #tpu.memory_space<vmem>>, %arg2: memref<784x512xbf16, #tpu.memory_space<vmem>>, %arg3: memref<1x512xf32, #tpu.memory_space<vmem>>, %arg4: memref<512x256xbf16, #tpu.memory_space<vmem>>, %arg5: memref<1x256xf32, #tpu.memory_space<vmem>>, %arg6: memref<1x256xf32, #tpu.memory_space<vmem>>, %arg7: memref<1x1xf32, #tpu.memory_space<vmem>>, %arg8: memref<40x1xf32, #tpu.memory_space<vmem>>) attributes {dimension_semantics = [#tpu.dimension_semantics<parallel>], iteration_bounds = array<i64: 1>, scalar_prefetch = 0 : i64, scratch_operands = 0 : i64, tpu.core_type = #tpu.core_type<tc>, window_params = [{transform_indices = @transform_0, window_bounds = array<i64: 40, 784>}, {pipeline_mode = #tpu.pipeline_mode<synchronous>, transform_indices = @transform_1, window_bounds = array<i64: 784, 512>}, {pipeline_mode = #tpu.pipeline_mode<synchronous>, transform_indices = @transform_2, window_bounds = array<i64: 1, 512>}, {pipeline_mode = #tpu.pipeline_mode<synchronous>, transform_indices = @transform_3, window_bounds = array<i64: 512, 256>}, {pipeline_mode = #tpu.pipeline_mode<synchronous>, transform_indices = @transform_4, window_bounds = array<i64: 1, 256>}, {pipeline_mode = #tpu.pipeline_mode<synchronous>, transform_indices = @transform_5, window_bounds = array<i64: 1, 256>}, {pipeline_mode = #tpu.pipeline_mode<synchronous>, transform_indices = @transform_6, window_bounds = array<i64: 1, 1>}, {transform_indices = @transform_7, window_bounds = array<i64: 40, 1>}]} {
    %c0 = arith.constant 0 : index
    %c0_0 = arith.constant 0 : index
    %0 = vector.load %arg1[%c0, %c0_0] : memref<40x784xf32, #tpu.memory_space<vmem>>, vector<40x784xf32>
    %1 = arith.truncf %0 : vector<40x784xf32> to vector<40x784xbf16>
    %c0_1 = arith.constant 0 : index
    %c0_2 = arith.constant 0 : index
    %2 = vector.load %arg2[%c0_1, %c0_2] : memref<784x512xbf16, #tpu.memory_space<vmem>>, vector<784x512xbf16>
    %cst = arith.constant dense<0.000000e+00> : vector<40x512xf32>
    %3 = tpu.matmul %1, %2, %cst {dimension_numbers = #tpu.dot_dimension_numbers<[1], [0], [0], [1], [0, 0, 1, 1], [], []>} : vector<40x784xbf16>, vector<784x512xbf16>, vector<40x512xf32> -> vector<40x512xf32>
    %c0_3 = arith.constant 0 : index
    %c0_4 = arith.constant 0 : index
    %4 = vector.load %arg3[%c0_3, %c0_4] : memref<1x512xf32, #tpu.memory_space<vmem>>, vector<1x512xf32>
    %5 = vector.broadcast %4 : vector<1x512xf32> to vector<40x512xf32>
    %6 = arith.addf %3, %5 : vector<40x512xf32>
    %cst_5 = arith.constant 0.000000e+00 : f32
    %7 = vector.broadcast %cst_5 : f32 to vector<40x512xf32>
    %8 = arith.cmpf ogt, %6, %7 : vector<40x512xf32>
    %cst_6 = arith.constant 2.000000e-01 : f32
    %9 = vector.broadcast %cst_6 : f32 to vector<40x512xf32>
    %10 = arith.mulf %9, %6 : vector<40x512xf32>
    %11 = arith.select %8, %6, %10 : vector<40x512xi1>, vector<40x512xf32>
    %12 = arith.truncf %11 : vector<40x512xf32> to vector<40x512xbf16>
    %c0_7 = arith.constant 0 : index
    %c0_8 = arith.constant 0 : index
    %13 = vector.load %arg4[%c0_7, %c0_8] : memref<512x256xbf16, #tpu.memory_space<vmem>>, vector<512x256xbf16>
    %cst_9 = arith.constant dense<0.000000e+00> : vector<40x256xf32>
    %14 = tpu.matmul %12, %13, %cst_9 {dimension_numbers = #tpu.dot_dimension_numbers<[1], [0], [0], [1], [0, 0, 1, 1], [], []>} : vector<40x512xbf16>, vector<512x256xbf16>, vector<40x256xf32> -> vector<40x256xf32>
    %c0_10 = arith.constant 0 : index
    %c0_11 = arith.constant 0 : index
    %15 = vector.load %arg5[%c0_10, %c0_11] : memref<1x256xf32, #tpu.memory_space<vmem>>, vector<1x256xf32>
    %16 = vector.broadcast %15 : vector<1x256xf32> to vector<40x256xf32>
    %17 = arith.addf %14, %16 : vector<40x256xf32>
    %cst_12 = arith.constant 0.000000e+00 : f32
    %18 = vector.broadcast %cst_12 : f32 to vector<40x256xf32>
    %19 = arith.cmpf ogt, %17, %18 : vector<40x256xf32>
    %cst_13 = arith.constant 2.000000e-01 : f32
    %20 = vector.broadcast %cst_13 : f32 to vector<40x256xf32>
    %21 = arith.mulf %20, %17 : vector<40x256xf32>
    %22 = arith.select %19, %17, %21 : vector<40x256xi1>, vector<40x256xf32>
    %c0_14 = arith.constant 0 : index
    %c0_15 = arith.constant 0 : index
    %23 = vector.load %arg6[%c0_14, %c0_15] : memref<1x256xf32, #tpu.memory_space<vmem>>, vector<1x256xf32>
    %24 = vector.broadcast %23 : vector<1x256xf32> to vector<40x256xf32>
    %25 = arith.mulf %22, %24 : vector<40x256xf32>
    %cst_16 = arith.constant dense<0.000000e+00> : vector<40xf32>
    %26 = vector.multi_reduction <add>, %25, %cst_16 [1] : vector<40x256xf32> to vector<40xf32>
    %27 = vector.shape_cast %26 : vector<40xf32> to vector<40x1xf32>
    %c0_17 = arith.constant 0 : index
    %c0_18 = arith.constant 0 : index
    %28 = vector.load %arg7[%c0_17, %c0_18] : memref<1x1xf32, #tpu.memory_space<vmem>>, vector<1x1xf32>
    %29 = vector.broadcast %28 : vector<1x1xf32> to vector<40x1xf32>
    %30 = arith.addf %27, %29 : vector<40x1xf32>
    %cst_19 = arith.constant 0.000000e+00 : f32
    %31 = vector.broadcast %cst_19 : f32 to vector<40x1xf32>
    %32 = arith.subf %31, %30 : vector<40x1xf32>
    %33 = math.exp %32 : vector<40x1xf32>
    %cst_20 = arith.constant 1.000000e+00 : f32
    %34 = vector.broadcast %cst_20 : f32 to vector<40x1xf32>
    %35 = arith.addf %34, %33 : vector<40x1xf32>
    %cst_21 = arith.constant 1.000000e+00 : f32
    %36 = vector.broadcast %cst_21 : f32 to vector<40x1xf32>
    %37 = arith.divf %36, %35 : vector<40x1xf32>
    %c0_22 = arith.constant 0 : index
    %c0_23 = arith.constant 0 : index
    %38 = vector.load %arg8[%c0_22, %c0_23] : memref<40x1xf32, #tpu.memory_space<vmem>>, vector<40x1xf32>
    tpu.vector_store %arg8[%c0_22, %c0_23], %37 {strides = array<i32>} : memref<40x1xf32, #tpu.memory_space<vmem>>, vector<40x1xf32>,
    return
  }
  func.func @transform_0(%arg0: i32) -> (i32, i32) {
    %c0_i32 = arith.constant 0 : i32
    %c0_i32_0 = arith.constant 0 : i32
    return %arg0, %c0_i32 : i32, i32
  }
  func.func @transform_1(%arg0: i32) -> (i32, i32) {
    %c0_i32 = arith.constant 0 : i32
    %c0_i32_0 = arith.constant 0 : i32
    %c0_i32_1 = arith.constant 0 : i32
    return %c0_i32, %c0_i32_0 : i32, i32
  }
  func.func @transform_2(%arg0: i32) -> (i32, i32) {
    %c0_i32 = arith.constant 0 : i32
    %c0_i32_0 = arith.constant 0 : i32
    %c0_i32_1 = arith.constant 0 : i32
    return %c0_i32, %c0_i32_0 : i32, i32
  }
  func.func @transform_3(%arg0: i32) -> (i32, i32) {
    %c0_i32 = arith.constant 0 : i32
    %c0_i32_0 = arith.constant 0 : i32
    %c0_i32_1 = arith.constant 0 : i32
    return %c0_i32, %c0_i32_0 : i32, i32
  }
  func.func @transform_4(%arg0: i32) -> (i32, i32) {
    %c0_i32 = arith.constant 0 : i32
    %c0_i32_0 = arith.constant 0 : i32
    %c0_i32_1 = arith.constant 0 : i32
    return %c0_i32, %c0_i32_0 : i32, i32
  }
  func.func @transform_5(%arg0: i32) -> (i32, i32) {
    %c0_i32 = arith.constant 0 : i32
    %c0_i32_0 = arith.constant 0 : i32
    %c0_i32_1 = arith.constant 0 : i32
    return %c0_i32, %c0_i32_0 : i32, i32
  }
  func.func @transform_6(%arg0: i32) -> (i32, i32) {
    %c0_i32 = arith.constant 0 : i32
    %c0_i32_0 = arith.constant 0 : i32
    %c0_i32_1 = arith.constant 0 : i32
    return %c0_i32, %c0_i32_0 : i32, i32
  }
  func.func @transform_7(%arg0: i32) -> (i32, i32) {
    %c0_i32 = arith.constant 0 : i32
    %c0_i32_0 = arith.constant 0 : i32
    return %arg0, %c0_i32 : i32, i32
  }
}

</mosaic_0001>

<llo_original>
// kernel: discriminator_forward.1
$region0: #{discriminator_forward.1}
  #allocation0 [shape = 'u32[]', space=smem, size = 0x4, offset = 0x4, fixed_abs, tag = 'smem constant byte address 0x4 - core index']
  #allocation1 [shape = 'u32[144,128]{1,0:T(1,128)}', space=vmem, size = 0x12000, scoped, tag = 'internal scratch']
  #allocation2 [shape = 'f32[1,1]{1,0:T(1,128)S(1)}', space=vmem, size = 0x200, scoped, tag = 'scoped memory for discriminator_forward.1']
  %s0 = inlined_call_operand.vmem [shape: f32[40,784], index: 0, kind: input, shape index: {}]
  %s1 = inlined_call_operand.hbm [shape: bf16[784,512], index: 1, kind: input, shape index: {}]
  %s2 = inlined_call_operand.vmem [shape: f32[1,512], index: 2, kind: input, shape index: {}]
  %s3 = inlined_call_operand.vmem [shape: bf16[512,256], index: 3, kind: input, shape index: {}]
  %s4 = inlined_call_operand.vmem [shape: f32[1,256], index: 4, kind: input, shape index: {}]
  %s5 = inlined_call_operand.vmem [shape: f32[1,256], index: 5, kind: input, shape index: {}]
  %s6 = inlined_call_operand.<no memory space> [shape: f32[1,1], index: 6, kind: input, shape index: {}]
  %s7 = inlined_call_operand.vmem [shape: f32[40,1], index: 7, kind: output, shape index: {}]
  %s8 = sld [smem:[#allocation0]]
  $region42: #{discriminator_forward.1} parent=0
    _
  %s10 = ssub.s32 1, %s8
  %s11 = scalar_select 0, %s10, %s8
  %v12 = vstv %s6
  %13 = vst [vmem:[#allocation2] sm:$0x1] %v12
  $region1: #{discriminator_forward.1} parent=0
    #allocation3 [shape = 'u8[802816]{0}', space=vmem, size = 0xc4000, scoped, tag = 'input window, operand 1, single buffered']
    #allocation4 [shape = 's32[1]{0}', space=sflag, size = 0x4, scoped, tag = 'scoped memory for discriminator_forward.1']
    %14 = vsyncpa [#allocation4], 0
    // Predicated region
    $region2: #{discriminator_forward.1} parent=1 // pred_check
      _
    $region3: #{discriminator_forward.1} parent=1 // pred_check_branch
      %16 = sbr.rel (0) target = $region5
    $region4: #{discriminator_forward.1} parent=1 // pred_region
      _
    $region5: #{discriminator_forward.1} parent=1 // pred_fallthru
      _
    // Predicated region
    $region6: #{discriminator_forward.1} parent=1 // pred_check
      _
    $region7: #{discriminator_forward.1} parent=1 // pred_check_branch
      %18 = sbr.rel (0) target = $region9
    $region8: #{discriminator_forward.1} parent=1 // pred_region
      %s20 = ssub.s32 25088, 25088
      %21 = vsyncadd [#allocation4], %s20
      %s22 = sshll.u32 [#allocation3], 4
      %s23 = int_to_ptr.vmem [resolvable:$true] %s22
      %28 = dma.hbm_to_vmem [thread:$0]  %s1, 25088, %s23, [#allocation4], 256, 256, 16
    $region9: #{discriminator_forward.1} parent=1 // pred_fallthru
      _
    // Predicated region
    $region10: #{discriminator_forward.1} parent=1 // pred_check
      _
    $region11: #{discriminator_forward.1} parent=1 // pred_check_branch
      %30 = sbr.rel (0) target = $region13
    $region12: #{discriminator_forward.1} parent=1 // pred_region
      _
    $region13: #{discriminator_forward.1} parent=1 // pred_fallthru
      _
    // Predicated region
    $region14: #{discriminator_forward.1} parent=1 // pred_check
      _
    $region15: #{discriminator_forward.1} parent=1 // pred_check_branch
      %32 = sbr.rel (0) target = $region17
    $region16: #{discriminator_forward.1} parent=1 // pred_region
      _
    $region17: #{discriminator_forward.1} parent=1 // pred_fallthru
      _
    // Predicated region
    $region18: #{discriminator_forward.1} parent=1 // pred_check
      _
    $region19: #{discriminator_forward.1} parent=1 // pred_check_branch
      %34 = sbr.rel (0) target = $region21
    $region20: #{discriminator_forward.1} parent=1 // pred_region
      _
    $region21: #{discriminator_forward.1} parent=1 // pred_fallthru
      _
    // Predicated region
    $region22: #{discriminator_forward.1} parent=1 // pred_check
      _
    $region23: #{discriminator_forward.1} parent=1 // pred_check_branch
      %36 = sbr.rel (0) target = $region25
    $region24: #{discriminator_forward.1} parent=1 // pred_region
      _
    $region25: #{discriminator_forward.1} parent=1 // pred_fallthru
      _
    // Predicated region
    $region26: #{discriminator_forward.1} parent=1 // pred_check
      _
    $region27: #{discriminator_forward.1} parent=1 // pred_check_branch
      %38 = sbr.rel (0) target = $region29
    $region28: #{discriminator_forward.1} parent=1 // pred_region
      _
    $region29: #{discriminator_forward.1} parent=1 // pred_fallthru
      _
    // Predicated region
    $region30: #{discriminator_forward.1} parent=1 // pred_check
      _
    $region31: #{discriminator_forward.1} parent=1 // pred_check_branch
      %40 = sbr.rel (0) target = $region33
    $region32: #{discriminator_forward.1} parent=1 // pred_region
      %41 = dma.done [#allocation4], 25088
    $region33: #{discriminator_forward.1} parent=1 // pred_fallthru
      _
    %v43 = vld [vmem:[%s0] sm:$0xff]
    %v44 = vld [vmem:[%s0 + $0x8] sm:$0xff]
    %v45 = vld [vmem:[%s0 + $0x10] sm:$0xff]
    %v46 = vld [vmem:[%s0 + $0x18] sm:$0xff]
    %v47 = vld [vmem:[%s0 + $0x20] sm:$0xff]
    %v48 = vld [vmem:[%s0 + $0x28] sm:$0xff]
    %v49 = vld [vmem:[%s0 + $0x30] sm:$0xff]
    %v50 = vld [vmem:[%s0 + $0x38] sm:$0xff]
    %v51 = vld [vmem:[%s0 + $0x40] sm:$0xff]
    %v52 = vld [vmem:[%s0 + $0x48] sm:$0xff]
    %v53 = vld [vmem:[%s0 + $0x50] sm:$0xff]
    %v54 = vld [vmem:[%s0 + $0x58] sm:$0xff]
    %v55 = vld [vmem:[%s0 + $0x60] sm:$0xff]
    %v56 = vld [vmem:[%s0 + $0x68] sm:$0xff]
    %v57 = vld [vmem:[%s0 + $0x70] sm:$0xff]
    %v58 = vld [vmem:[%s0 + $0x78] sm:$0xff]
    %v59 = vld [vmem:[%s0 + $0x80] sm:$0xff]
    %v60 = vld [vmem:[%s0 + $0x88] sm:$0xff]
    %v61 = vld [vmem:[%s0 + $0x90] sm:$0xff]
    %v62 = vld [vmem:[%s0 + $0x98] sm:$0xff]
    %v63 = vld [vmem:[%s0 + $0xa0] sm:$0xff]
    %v64 = vld [vmem:[%s0 + $0xa8] sm:$0xff]
    %v65 = vld [vmem:[%s0 + $0xb0] sm:$0xff]
    %v66 = vld [vmem:[%s0 + $0xb8] sm:$0xff]
    %v67 = vld [vmem:[%s0 + $0xc0] sm:$0xff]
    %v68 = vld [vmem:[%s0 + $0xc8] sm:$0xff]
    %v69 = vld [vmem:[%s0 + $0xd0] sm:$0xff]
    %v70 = vld [vmem:[%s0 + $0xd8] sm:$0xff]
    %v71 = vld [vmem:[%s0 + $0xe0] sm:$0xff]
    %v72 = vld [vmem:[%s0 + $0xe8] sm:$0xff]
    %v73 = vld [vmem:[%s0 + $0xf0] sm:$0xff]
    %v74 = vld [vmem:[%s0 + $0xf8] sm:$0xff]
    %v75 = vld [vmem:[%s0 + $0x100] sm:$0xff]
    %v76 = vld [vmem:[%s0 + $0x108] sm:$0xff]
    %v77 = vld [vmem:[%s0 + $0x110] sm:$0xff]
    %v78 = vpack.c.bf16 %v50, %v43
    %v79 = vpack.c.bf16 %v51, %v44
    %v80 = vpack.c.bf16 %v52, %v45
    %v81 = vpack.c.bf16 %v53, %v46
    %v82 = vpack.c.bf16 %v54, %v47
    %v83 = vpack.c.bf16 %v55, %v48
    %v84 = vpack.c.bf16 %v56, %v49
    %v85 = vpack.c.bf16 %v64, %v57
    %v86 = vpack.c.bf16 %v65, %v58
    %v87 = vpack.c.bf16 %v66, %v59
    %v88 = vpack.c.bf16 %v67, %v60
    %v89 = vpack.c.bf16 %v68, %v61
    %v90 = vpack.c.bf16 %v69, %v62
    %v91 = vpack.c.bf16 %v70, %v63
    %v92 = vpack.c.bf16 %v71, %v71
    %v93 = vpack.c.bf16 %v72, %v72
    %v94 = vpack.c.bf16 %v73, %v73
    %v95 = vpack.c.bf16 %v74, %v74
    %v96 = vpack.c.bf16 %v75, %v75
    %v97 = vpack.c.bf16 %v76, %v76
    %v98 = vpack.c.bf16 %v77, %v77
    %v99 = vld [vmem:[#allocation3] sm:$0xff]
    %v100 = vld [vmem:[#allocation3 + $0x8] sm:$0xff]
    %v101 = vld [vmem:[#allocation3 + $0x10] sm:$0xff]
    %v102 = vld [vmem:[#allocation3 + $0x18] sm:$0xff]
    %v103 = vld [vmem:[#allocation3 + $0x20] sm:$0xff]
    %v104 = vld [vmem:[#allocation3 + $0x28] sm:$0xff]
    %v105 = vld [vmem:[#allocation3 + $0x30] sm:$0xff]
    %v106 = vld [vmem:[#allocation3 + $0x38] sm:$0xff]
    %v107 = vld [vmem:[#allocation3 + $0x40] sm:$0xff]
    %v108 = vld [vmem:[#allocation3 + $0x48] sm:$0xff]
    %v109 = vld [vmem:[#allocation3 + $0x50] sm:$0xff]
    %v110 = vld [vmem:[#allocation3 + $0x58] sm:$0xff]
    %v111 = vld [vmem:[#allocation3 + $0x60] sm:$0xff]
    %v112 = vld [vmem:[#allocation3 + $0x68] sm:$0xff]
    %v113 = vld [vmem:[#allocation3 + $0x70] sm:$0xff]
    %v114 = vld [vmem:[#allocation3 + $0x78] sm:$0xff]
    %v115 = vld [vmem:[#allocation3 + $0x80] sm:$0xff]
    %v116 = vld [vmem:[#allocation3 + $0x88] sm:$0xff]
    %v117 = vld [vmem:[#allocation3 + $0x90] sm:$0xff]
    %v118 = vld [vmem:[#allocation3 + $0x98] sm:$0xff]
    %v119 = vld [vmem:[#allocation3 + $0xa0] sm:$0xff]
    %v120 = vld [vmem:[#allocation3 + $0xa8] sm:$0xff]
    %v121 = vld [vmem:[#allocation3 + $0xb0] sm:$0xff]
    %v122 = vld [vmem:[#allocation3 + $0xb8] sm:$0xff]
    %v123 = vld [vmem:[#allocation3 + $0xc0] sm:$0xff]
    %v124 = vld [vmem:[#allocation3 + $0xc8] sm:$0xff]
    %v125 = vld [vmem:[#allocation3 + $0xd0] sm:$0xff]
    %v126 = vld [vmem:[#allocation3 + $0xd8] sm:$0xff]
    %v127 = vld [vmem:[#allocation3 + $0xe0] sm:$0xff]
    %v128 = vld [vmem:[#allocation3 + $0xe8] sm:$0xff]
    %v129 = vld [vmem:[#allocation3 + $0xf0] sm:$0xff]
    %v130 = vld [vmem:[#allocation3 + $0xf8] sm:$0xff]
    %v131 = vld [vmem:[#allocation3 + $0x100] sm:$0xff]
    %v132 = vld [vmem:[#allocation3 + $0x108] sm:$0xff]
    %v133 = vld [vmem:[#allocation3 + $0x110] sm:$0xff]
    %v134 = vld [vmem:[#allocation3 + $0x118] sm:$0xff]
    %v135 = vld [vmem:[#allocation3 + $0x120] sm:$0xff]
    %v136 = vld [vmem:[#allocation3 + $0x128] sm:$0xff]
    %v137 = vld [vmem:[#allocation3 + $0x130] sm:$0xff]
    %v138 = vld [vmem:[#allocation3 + $0x138] sm:$0xff]
    %v139 = vld [vmem:[#allocation3 + $0x140] sm:$0xff]
    %v140 = vld [vmem:[#allocation3 + $0x148] sm:$0xff]
    %v141 = vld [vmem:[#allocation3 + $0x150] sm:$0xff]
    %v142 = vld [vmem:[#allocation3 + $0x158] sm:$0xff]
    %v143 = vld [vmem:[#allocation3 + $0x160] sm:$0xff]
    %v144 = vld [vmem:[#allocation3 + $0x168] sm:$0xff]
    %v145 = vld [vmem:[#allocation3 + $0x170] sm:$0xff]
    %v146 = vld [vmem:[#allocation3 + $0x178] sm:$0xff]
    %v147 = vld [vmem:[#allocation3 + $0x180] sm:$0xff]
    %v148 = vld [vmem:[#allocation3 + $0x188] sm:$0xff]
    %v149 = vld [vmem:[#allocation3 + $0x190] sm:$0xff]
    %v150 = vld [vmem:[#allocation3 + $0x198] sm:$0xff]
    %v151 = vld [vmem:[#allocation3 + $0x1a0] sm:$0xff]
    %v152 = vld [vmem:[#allocation3 + $0x1a8] sm:$0xff]
    %v153 = vld [vmem:[#allocation3 + $0x1b0] sm:$0xff]
    %v154 = vld [vmem:[#allocation3 + $0x1b8] sm:$0xff]
    %v155 = vld [vmem:[#allocation3 + $0x1c0] sm:$0xff]
    %v156 = vld [vmem:[#allocation3 + $0x1c8] sm:$0xff]
    %v157 = vld [vmem:[#allocation3 + $0x1d0] sm:$0xff]
    %v158 = vld [vmem:[#allocation3 + $0x1d8] sm:$0xff]
    %v159 = vld [vmem:[#allocation3 + $0x1e0] sm:$0xff]
    %v160 = vld [vmem:[#allocation3 + $0x1e8] sm:$0xff]
    %v161 = vld [vmem:[#allocation3 + $0x1f0] sm:$0xff]
    %v162 = vld [vmem:[#allocation3 + $0x1f8] sm:$0xff]
    %v163 = vld [vmem:[#allocation3 + $0x200] sm:$0xff]
    %v164 = vld [vmem:[#allocation3 + $0x208] sm:$0xff]
    %v165 = vld [vmem:[#allocation3 + $0x210] sm:$0xff]
    %v166 = vld [vmem:[#allocation3 + $0x218] sm:$0xff]
    %v167 = vld [vmem:[#allocation3 + $0x220] sm:$0xff]
    %v168 = vld [vmem:[#allocation3 + $0x228] sm:$0xff]
    %v169 = vld [vmem:[#allocation3 + $0x230] sm:$0xff]
    %v170 = vld [vmem:[#allocation3 + $0x238] sm:$0xff]
    %v171 = vld [vmem:[#allocation3 + $0x240] sm:$0xff]
    %v172 = vld [vmem:[#allocation3 + $0x248] sm:$0xff]
    %v173 = vld [vmem:[#allocation3 + $0x250] sm:$0xff]
    %v174 = vld [vmem:[#allocation3 + $0x258] sm:$0xff]
    %v175 = vld [vmem:[#allocation3 + $0x260] sm:$0xff]
    %v176 = vld [vmem:[#allocation3 + $0x268] sm:$0xff]
    %v177 = vld [vmem:[#allocation3 + $0x270] sm:$0xff]
    %v178 = vld [vmem:[#allocation3 + $0x278] sm:$0xff]
    %v179 = vld [vmem:[#allocation3 + $0x280] sm:$0xff]
    %v180 = vld [vmem:[#allocation3 + $0x288] sm:$0xff]
    %v181 = vld [vmem:[#allocation3 + $0x290] sm:$0xff]
    %v182 = vld [vmem:[#allocation3 + $0x298] sm:$0xff]
    %v183 = vld [vmem:[#allocation3 + $0x2a0] sm:$0xff]
    %v184 = vld [vmem:[#allocation3 + $0x2a8] sm:$0xff]
    %v185 = vld [vmem:[#allocation3 + $0x2b0] sm:$0xff]
    %v186 = vld [vmem:[#allocation3 + $0x2b8] sm:$0xff]
    %v187 = vld [vmem:[#allocation3 + $0x2c0] sm:$0xff]
    %v188 = vld [vmem:[#allocation3 + $0x2c8] sm:$0xff]
    %v189 = vld [vmem:[#allocation3 + $0x2d0] sm:$0xff]
    %v190 = vld [vmem:[#allocation3 + $0x2d8] sm:$0xff]
    %v191 = vld [vmem:[#allocation3 + $0x2e0] sm:$0xff]
    %v192 = vld [vmem:[#allocation3 + $0x2e8] sm:$0xff]
    %v193 = vld [vmem:[#allocation3 + $0x2f0] sm:$0xff]
    %v194 = vld [vmem:[#allocation3 + $0x2f8] sm:$0xff]
    %v195 = vld [vmem:[#allocation3 + $0x300] sm:$0xff]
    %v196 = vld [vmem:[#allocation3 + $0x308] sm:$0xff]
    %v197 = vld [vmem:[#allocation3 + $0x310] sm:$0xff]
    %v198 = vld [vmem:[#allocation3 + $0x318] sm:$0xff]
    %v199 = vld [vmem:[#allocation3 + $0x320] sm:$0xff]
    %v200 = vld [vmem:[#allocation3 + $0x328] sm:$0xff]
    %v201 = vld [vmem:[#allocation3 + $0x330] sm:$0xff]
    %v202 = vld [vmem:[#allocation3 + $0x338] sm:$0xff]
    %v203 = vld [vmem:[#allocation3 + $0x340] sm:$0xff]
    %v204 = vld [vmem:[#allocation3 + $0x348] sm:$0xff]
    %v205 = vld [vmem:[#allocation3 + $0x350] sm:$0xff]
    %v206 = vld [vmem:[#allocation3 + $0x358] sm:$0xff]
    %v207 = vld [vmem:[#allocation3 + $0x360] sm:$0xff]
    %v208 = vld [vmem:[#allocation3 + $0x368] sm:$0xff]
    %v209 = vld [vmem:[#allocation3 + $0x370] sm:$0xff]
    %v210 = vld [vmem:[#allocation3 + $0x378] sm:$0xff]
    %v211 = vld [vmem:[#allocation3 + $0x380] sm:$0xff]
    %v212 = vld [vmem:[#allocation3 + $0x388] sm:$0xff]
    %v213 = vld [vmem:[#allocation3 + $0x390] sm:$0xff]
    %v214 = vld [vmem:[#allocation3 + $0x398] sm:$0xff]
    %v215 = vld [vmem:[#allocation3 + $0x3a0] sm:$0xff]
    %v216 = vld [vmem:[#allocation3 + $0x3a8] sm:$0xff]
    %v217 = vld [vmem:[#allocation3 + $0x3b0] sm:$0xff]
    %v218 = vld [vmem:[#allocation3 + $0x3b8] sm:$0xff]
    %v219 = vld [vmem:[#allocation3 + $0x3c0] sm:$0xff]
    %v220 = vld [vmem:[#allocation3 + $0x3c8] sm:$0xff]
    %v221 = vld [vmem:[#allocation3 + $0x3d0] sm:$0xff]
    %v222 = vld [vmem:[#allocation3 + $0x3d8] sm:$0xff]
    %v223 = vld [vmem:[#allocation3 + $0x3e0] sm:$0xff]
    %v224 = vld [vmem:[#allocation3 + $0x3e8] sm:$0xff]
    %v225 = vld [vmem:[#allocation3 + $0x3f0] sm:$0xff]
    %v226 = vld [vmem:[#allocation3 + $0x3f8] sm:$0xff]
    %v227 = vld [vmem:[#allocation3 + $0x400] sm:$0xff]
    %v228 = vld [vmem:[#allocation3 + $0x408] sm:$0xff]
    %v229 = vld [vmem:[#allocation3 + $0x410] sm:$0xff]
    %v230 = vld [vmem:[#allocation3 + $0x418] sm:$0xff]
    %v231 = vld [vmem:[#allocation3 + $0x420] sm:$0xff]
    %v232 = vld [vmem:[#allocation3 + $0x428] sm:$0xff]
    %v233 = vld [vmem:[#allocation3 + $0x430] sm:$0xff]
    %v234 = vld [vmem:[#allocation3 + $0x438] sm:$0xff]
    %v235 = vld [vmem:[#allocation3 + $0x440] sm:$0xff]
    %v236 = vld [vmem:[#allocation3 + $0x448] sm:$0xff]
    %v237 = vld [vmem:[#allocation3 + $0x450] sm:$0xff]
    %v238 = vld [vmem:[#allocation3 + $0x458] sm:$0xff]
    %v239 = vld [vmem:[#allocation3 + $0x460] sm:$0xff]
    %v240 = vld [vmem:[#allocation3 + $0x468] sm:$0xff]
    %v241 = vld [vmem:[#allocation3 + $0x470] sm:$0xff]
    %v242 = vld [vmem:[#allocation3 + $0x478] sm:$0xff]
    %v243 = vld [vmem:[#allocation3 + $0x480] sm:$0xff]
    %v244 = vld [vmem:[#allocation3 + $0x488] sm:$0xff]
    %v245 = vld [vmem:[#allocation3 + $0x490] sm:$0xff]
    %v246 = vld [vmem:[#allocation3 + $0x498] sm:$0xff]
    %v247 = vld [vmem:[#allocation3 + $0x4a0] sm:$0xff]
    %v248 = vld [vmem:[#allocation3 + $0x4a8] sm:$0xff]
    %v249 = vld [vmem:[#allocation3 + $0x4b0] sm:$0xff]
    %v250 = vld [vmem:[#allocation3 + $0x4b8] sm:$0xff]
    %v251 = vld [vmem:[#allocation3 + $0x4c0] sm:$0xff]
    %v252 = vld [vmem:[#allocation3 + $0x4c8] sm:$0xff]
    %v253 = vld [vmem:[#allocation3 + $0x4d0] sm:$0xff]
    %v254 = vld [vmem:[#allocation3 + $0x4d8] sm:$0xff]
    %v255 = vld [vmem:[#allocation3 + $0x4e0] sm:$0xff]
    %v256 = vld [vmem:[#allocation3 + $0x4e8] sm:$0xff]
    %v257 = vld [vmem:[#allocation3 + $0x4f0] sm:$0xff]
    %v258 = vld [vmem:[#allocation3 + $0x4f8] sm:$0xff]
    %v259 = vld [vmem:[#allocation3 + $0x500] sm:$0xff]
    %v260 = vld [vmem:[#allocation3 + $0x508] sm:$0xff]
    %v261 = vld [vmem:[#allocation3 + $0x510] sm:$0xff]
    %v262 = vld [vmem:[#allocation3 + $0x518] sm:$0xff]
    %v263 = vld [vmem:[#allocation3 + $0x520] sm:$0xff]
    %v264 = vld [vmem:[#allocation3 + $0x528] sm:$0xff]
    %v265 = vld [vmem:[#allocation3 + $0x530] sm:$0xff]
    %v266 = vld [vmem:[#allocation3 + $0x538] sm:$0xff]
    %v267 = vld [vmem:[#allocation3 + $0x540] sm:$0xff]
    %v268 = vld [vmem:[#allocation3 + $0x548] sm:$0xff]
    %v269 = vld [vmem:[#allocation3 + $0x550] sm:$0xff]
    %v270 = vld [vmem:[#allocation3 + $0x558] sm:$0xff]
    %v271 = vld [vmem:[#allocation3 + $0x560] sm:$0xff]
    %v272 = vld [vmem:[#allocation3 + $0x568] sm:$0xff]
    %v273 = vld [vmem:[#allocation3 + $0x570] sm:$0xff]
    %v274 = vld [vmem:[#allocation3 + $0x578] sm:$0xff]
    %v275 = vld [vmem:[#allocation3 + $0x580] sm:$0xff]
    %v276 = vld [vmem:[#allocation3 + $0x588] sm:$0xff]
    %v277 = vld [vmem:[#allocation3 + $0x590] sm:$0xff]
    %v278 = vld [vmem:[#allocation3 + $0x598] sm:$0xff]
    %v279 = vld [vmem:[#allocation3 + $0x5a0] sm:$0xff]
    %v280 = vld [vmem:[#allocation3 + $0x5a8] sm:$0xff]
    %v281 = vld [vmem:[#allocation3 + $0x5b0] sm:$0xff]
    %v282 = vld [vmem:[#allocation3 + $0x5b8] sm:$0xff]
    %v283 = vld [vmem:[#allocation3 + $0x5c0] sm:$0xff]
    %v284 = vld [vmem:[#allocation3 + $0x5c8] sm:$0xff]
    %v285 = vld [vmem:[#allocation3 + $0x5d0] sm:$0xff]
    %v286 = vld [vmem:[#allocation3 + $0x5d8] sm:$0xff]
    %v287 = vld [vmem:[#allocation3 + $0x5e0] sm:$0xff]
    %v288 = vld [vmem:[#allocation3 + $0x5e8] sm:$0xff]
    %v289 = vld [vmem:[#allocation3 + $0x5f0] sm:$0xff]
    %v290 = vld [vmem:[#allocation3 + $0x5f8] sm:$0xff]
    %v291 = vld [vmem:[#allocation3 + $0x600] sm:$0xff]
    %v292 = vld [vmem:[#allocation3 + $0x608] sm:$0xff]
    %v293 = vld [vmem:[#allocation3 + $0x610] sm:$0xff]
    %v294 = vld [vmem:[#allocation3 + $0x618] sm:$0xff]
    %v295 = vld [vmem:[%s2] sm:$0xf]
    %v297 = vlaneseq
    %v298 = vshrl.u32 %v297, 7
    %v299 = vsub.s32 0, %v298
    %v300 = vrot.slane %v295, %v299
    %v301 = vlaneseq
    %v302 = vshrl.u32 %v301, 7
    %v303 = vsub.s32 1, %v302
    %v304 = vrot.slane %v295, %v303
    %v305 = vlaneseq
    %v306 = vshrl.u32 %v305, 7
    %v307 = vsub.s32 2, %v306
    %v308 = vrot.slane %v295, %v307
    %v309 = vlaneseq
    %v310 = vshrl.u32 %v309, 7
    %v311 = vsub.s32 3, %v310
    %v312 = vrot.slane %v295, %v311
    %v513 = vunpack.c.l.b16 %v99
    %v514 = vunpack.c.h.b16 %v99
    %v515 = vunpack.c.l.b16 %v100
    %v516 = vunpack.c.h.b16 %v100
    %v517 = vunpack.c.l.b16 %v101
    %v518 = vunpack.c.h.b16 %v101
    %v519 = vunpack.c.l.b16 %v102
    %v520 = vunpack.c.h.b16 %v102
    %v521 = vunpack.c.l.b16 %v103
    %v522 = vunpack.c.h.b16 %v103
    %v523 = vunpack.c.l.b16 %v104
    %v524 = vunpack.c.h.b16 %v104
    %v525 = vunpack.c.l.b16 %v105
    %v526 = vunpack.c.h.b16 %v105
    %v527 = vunpack.c.l.b16 %v106
    %v528 = vunpack.c.h.b16 %v106
    %v529 = vunpack.c.l.b16 %v107
    %v530 = vunpack.c.h.b16 %v107
    %v531 = vunpack.c.l.b16 %v108
    %v532 = vunpack.c.h.b16 %v108
    %v533 = vunpack.c.l.b16 %v109
    %v534 = vunpack.c.h.b16 %v109
    %v535 = vunpack.c.l.b16 %v110
    %v536 = vunpack.c.h.b16 %v110
    %v537 = vunpack.c.l.b16 %v111
    %v538 = vunpack.c.h.b16 %v111
    %v539 = vunpack.c.l.b16 %v112
    %v540 = vunpack.c.h.b16 %v112
    %v541 = vunpack.c.l.b16 %v113
    %v542 = vunpack.c.h.b16 %v113
    %v543 = vunpack.c.l.b16 %v114
    %v544 = vunpack.c.h.b16 %v114
    %v545 = vunpack.c.l.b16 %v115
    %v546 = vunpack.c.h.b16 %v115
    %v547 = vunpack.c.l.b16 %v116
    %v548 = vunpack.c.h.b16 %v116
    %v549 = vunpack.c.l.b16 %v117
    %v550 = vunpack.c.h.b16 %v117
    %v551 = vunpack.c.l.b16 %v118
    %v552 = vunpack.c.h.b16 %v118
    %v553 = vunpack.c.l.b16 %v119
    %v554 = vunpack.c.h.b16 %v119
    %v555 = vunpack.c.l.b16 %v120
    %v556 = vunpack.c.h.b16 %v120
    %v557 = vunpack.c.l.b16 %v121
    %v558 = vunpack.c.h.b16 %v121
    %v559 = vunpack.c.l.b16 %v122
    %v560 = vunpack.c.h.b16 %v122
    %v561 = vunpack.c.l.b16 %v123
    %v562 = vunpack.c.h.b16 %v123
    %v563 = vunpack.c.l.b16 %v124
    %v564 = vunpack.c.h.b16 %v124
    %v565 = vunpack.c.l.b16 %v125
    %v566 = vunpack.c.h.b16 %v125
    %v567 = vunpack.c.l.b16 %v126
    %v568 = vunpack.c.h.b16 %v126
    %v569 = vunpack.c.l.b16 %v127
    %v570 = vunpack.c.h.b16 %v127
    %v571 = vunpack.c.l.b16 %v128
    %v572 = vunpack.c.h.b16 %v128
    %v573 = vunpack.c.l.b16 %v129
    %v574 = vunpack.c.h.b16 %v129
    %v575 = vunpack.c.l.b16 %v130
    %v576 = vunpack.c.h.b16 %v130
    %v577 = vunpack.c.l.b16 %v131
    %v578 = vunpack.c.h.b16 %v131
    %v579 = vunpack.c.l.b16 %v132
    %v580 = vunpack.c.h.b16 %v132
    %v581 = vunpack.c.l.b16 %v133
    %v582 = vunpack.c.h.b16 %v133
    %v583 = vunpack.c.l.b16 %v134
    %v584 = vunpack.c.h.b16 %v134
    %v585 = vunpack.c.l.b16 %v135
    %v586 = vunpack.c.h.b16 %v135
    %v587 = vunpack.c.l.b16 %v136
    %v588 = vunpack.c.h.b16 %v136
    %v589 = vunpack.c.l.b16 %v137
    %v590 = vunpack.c.h.b16 %v137
    %v591 = vunpack.c.l.b16 %v138
    %v592 = vunpack.c.h.b16 %v138
    %v593 = vunpack.c.l.b16 %v139
    %v594 = vunpack.c.h.b16 %v139
    %v595 = vunpack.c.l.b16 %v140
    %v596 = vunpack.c.h.b16 %v140
    %v597 = vunpack.c.l.b16 %v141
    %v598 = vunpack.c.h.b16 %v141
    %v599 = vunpack.c.l.b16 %v142
    %v600 = vunpack.c.h.b16 %v142
    %v601 = vunpack.c.l.b16 %v143
    %v602 = vunpack.c.h.b16 %v143
    %v603 = vunpack.c.l.b16 %v144
    %v604 = vunpack.c.h.b16 %v144
    %v605 = vunpack.c.l.b16 %v145
    %v606 = vunpack.c.h.b16 %v145
    %v607 = vunpack.c.l.b16 %v146
    %v608 = vunpack.c.h.b16 %v146
    %v609 = vunpack.c.l.b16 %v147
    %v610 = vunpack.c.h.b16 %v147
    %v611 = vunpack.c.l.b16 %v148
    %v612 = vunpack.c.h.b16 %v148
    %v613 = vunpack.c.l.b16 %v149
    %v614 = vunpack.c.h.b16 %v149
    %v615 = vunpack.c.l.b16 %v150
    %v616 = vunpack.c.h.b16 %v150
    %v617 = vunpack.c.l.b16 %v151
    %v618 = vunpack.c.h.b16 %v151
    %v619 = vunpack.c.l.b16 %v152
    %v620 = vunpack.c.h.b16 %v152
    %v621 = vunpack.c.l.b16 %v153
    %v622 = vunpack.c.h.b16 %v153
    %v623 = vunpack.c.l.b16 %v154
    %v624 = vunpack.c.h.b16 %v154
    %v625 = vunpack.c.l.b16 %v155
    %v626 = vunpack.c.h.b16 %v155
    %v627 = vunpack.c.l.b16 %v156
    %v628 = vunpack.c.h.b16 %v156
    %v629 = vunpack.c.l.b16 %v157
    %v630 = vunpack.c.h.b16 %v157
    %v631 = vunpack.c.l.b16 %v158
    %v632 = vunpack.c.h.b16 %v158
    %v633 = vunpack.c.l.b16 %v159
    %v634 = vunpack.c.h.b16 %v159
    %v635 = vunpack.c.l.b16 %v160
    %v636 = vunpack.c.h.b16 %v160
    %v637 = vunpack.c.l.b16 %v161
    %v638 = vunpack.c.h.b16 %v161
    %v639 = vunpack.c.l.b16 %v162
    %v640 = vunpack.c.h.b16 %v162
    %v641 = vunpack.c.l.b16 %v163
    %v642 = vunpack.c.h.b16 %v163
    %v643 = vunpack.c.l.b16 %v164
    %v644 = vunpack.c.h.b16 %v164
    %v645 = vunpack.c.l.b16 %v165
    %v646 = vunpack.c.h.b16 %v165
    %v647 = vunpack.c.l.b16 %v166
    %v648 = vunpack.c.h.b16 %v166
    %v649 = vunpack.c.l.b16 %v167
    %v650 = vunpack.c.h.b16 %v167
    %v651 = vunpack.c.l.b16 %v168
    %v652 = vunpack.c.h.b16 %v168
    %v653 = vunpack.c.l.b16 %v169
    %v654 = vunpack.c.h.b16 %v169
    %v655 = vunpack.c.l.b16 %v170
    %v656 = vunpack.c.h.b16 %v170
    %v657 = vunpack.c.l.b16 %v171
    %v658 = vunpack.c.h.b16 %v171
    %v659 = vunpack.c.l.b16 %v172
    %v660 = vunpack.c.h.b16 %v172
    %v661 = vunpack.c.l.b16 %v173
    %v662 = vunpack.c.h.b16 %v173
    %v663 = vunpack.c.l.b16 %v174
    %v664 = vunpack.c.h.b16 %v174
    %v665 = vunpack.c.l.b16 %v175
    %v666 = vunpack.c.h.b16 %v175
    %v667 = vunpack.c.l.b16 %v176
    %v668 = vunpack.c.h.b16 %v176
    %v669 = vunpack.c.l.b16 %v177
    %v670 = vunpack.c.h.b16 %v177
    %v671 = vunpack.c.l.b16 %v178
    %v672 = vunpack.c.h.b16 %v178
    %v673 = vunpack.c.l.b16 %v179
    %v674 = vunpack.c.h.b16 %v179
    %v675 = vunpack.c.l.b16 %v180
    %v676 = vunpack.c.h.b16 %v180
    %v677 = vunpack.c.l.b16 %v181
    %v678 = vunpack.c.h.b16 %v181
    %v679 = vunpack.c.l.b16 %v182
    %v680 = vunpack.c.h.b16 %v182
    %v681 = vunpack.c.l.b16 %v183
    %v682 = vunpack.c.h.b16 %v183
    %v683 = vunpack.c.l.b16 %v184
    %v684 = vunpack.c.h.b16 %v184
    %v685 = vunpack.c.l.b16 %v185
    %v686 = vunpack.c.h.b16 %v185
    %v687 = vunpack.c.l.b16 %v186
    %v688 = vunpack.c.h.b16 %v186
    %v689 = vunpack.c.l.b16 %v187
    %v690 = vunpack.c.h.b16 %v187
    %v691 = vunpack.c.l.b16 %v188
    %v692 = vunpack.c.h.b16 %v188
    %v693 = vunpack.c.l.b16 %v189
    %v694 = vunpack.c.h.b16 %v189
    %v695 = vunpack.c.l.b16 %v190
    %v696 = vunpack.c.h.b16 %v190
    %v697 = vunpack.c.l.b16 %v191
    %v698 = vunpack.c.h.b16 %v191
    %v699 = vunpack.c.l.b16 %v192
    %v700 = vunpack.c.h.b16 %v192
    %v701 = vunpack.c.l.b16 %v193
    %v702 = vunpack.c.h.b16 %v193
    %v703 = vunpack.c.l.b16 %v194
    %v704 = vunpack.c.h.b16 %v194
    %v705 = vunpack.c.l.b16 %v195
    %v706 = vunpack.c.h.b16 %v195
    %v707 = vunpack.c.l.b16 %v196
    %v708 = vunpack.c.h.b16 %v196
    %v709 = vunpack.c.l.b16 %v197
    %v710 = vunpack.c.h.b16 %v197
    %v711 = vunpack.c.l.b16 %v198
    %v712 = vunpack.c.h.b16 %v198
    %v713 = vunpack.c.l.b16 %v199
    %v714 = vunpack.c.h.b16 %v199
    %v715 = vunpack.c.l.b16 %v200
    %v716 = vunpack.c.h.b16 %v200
    %v717 = vunpack.c.l.b16 %v201
    %v718 = vunpack.c.h.b16 %v201
    %v719 = vunpack.c.l.b16 %v202
    %v720 = vunpack.c.h.b16 %v202
    %v721 = vunpack.c.l.b16 %v203
    %v722 = vunpack.c.h.b16 %v203
    %v723 = vunpack.c.l.b16 %v204
    %v724 = vunpack.c.h.b16 %v204
    %v725 = vunpack.c.l.b16 %v205
    %v726 = vunpack.c.h.b16 %v205
    %v727 = vunpack.c.l.b16 %v206
    %v728 = vunpack.c.h.b16 %v206
    %v729 = vunpack.c.l.b16 %v207
    %v730 = vunpack.c.h.b16 %v207
    %v731 = vunpack.c.l.b16 %v208
    %v732 = vunpack.c.h.b16 %v208
    %v733 = vunpack.c.l.b16 %v209
    %v734 = vunpack.c.h.b16 %v209
    %v735 = vunpack.c.l.b16 %v210
    %v736 = vunpack.c.h.b16 %v210
    %v737 = vunpack.c.l.b16 %v211
    %v738 = vunpack.c.h.b16 %v211
    %v739 = vunpack.c.l.b16 %v212
    %v740 = vunpack.c.h.b16 %v212
    %v741 = vunpack.c.l.b16 %v213
    %v742 = vunpack.c.h.b16 %v213
    %v743 = vunpack.c.l.b16 %v214
    %v744 = vunpack.c.h.b16 %v214
    %v745 = vunpack.c.l.b16 %v215
    %v746 = vunpack.c.h.b16 %v215
    %v747 = vunpack.c.l.b16 %v216
    %v748 = vunpack.c.h.b16 %v216
    %v749 = vunpack.c.l.b16 %v217
    %v750 = vunpack.c.h.b16 %v217
    %v751 = vunpack.c.l.b16 %v218
    %v752 = vunpack.c.h.b16 %v218
    %v753 = vunpack.c.l.b16 %v219
    %v754 = vunpack.c.h.b16 %v219
    %v755 = vunpack.c.l.b16 %v220
    %v756 = vunpack.c.h.b16 %v220
    %v757 = vunpack.c.l.b16 %v221
    %v758 = vunpack.c.h.b16 %v221
    %v759 = vunpack.c.l.b16 %v222
    %v760 = vunpack.c.h.b16 %v222
    %v761 = vunpack.c.l.b16 %v223
    %v762 = vunpack.c.h.b16 %v223
    %v763 = vunpack.c.l.b16 %v224
    %v764 = vunpack.c.h.b16 %v224
    %v765 = vunpack.c.l.b16 %v225
    %v766 = vunpack.c.h.b16 %v225
    %v767 = vunpack.c.l.b16 %v226
    %v768 = vunpack.c.h.b16 %v226
    %v769 = vunpack.c.l.b16 %v227
    %v770 = vunpack.c.h.b16 %v227
    %v771 = vunpack.c.l.b16 %v228
    %v772 = vunpack.c.h.b16 %v228
    %v773 = vunpack.c.l.b16 %v229
    %v774 = vunpack.c.h.b16 %v229
    %v775 = vunpack.c.l.b16 %v230
    %v776 = vunpack.c.h.b16 %v230
    %v777 = vunpack.c.l.b16 %v231
    %v778 = vunpack.c.h.b16 %v231
    %v779 = vunpack.c.l.b16 %v232
    %v780 = vunpack.c.h.b16 %v232
    %v781 = vunpack.c.l.b16 %v233
    %v782 = vunpack.c.h.b16 %v233
    %v783 = vunpack.c.l.b16 %v234
    %v784 = vunpack.c.h.b16 %v234
    %v785 = vunpack.c.l.b16 %v235
    %v786 = vunpack.c.h.b16 %v235
    %v787 = vunpack.c.l.b16 %v236
    %v788 = vunpack.c.h.b16 %v236
    %v789 = vunpack.c.l.b16 %v237
    %v790 = vunpack.c.h.b16 %v237
    %v791 = vunpack.c.l.b16 %v238
    %v792 = vunpack.c.h.b16 %v238
    %v793 = vunpack.c.l.b16 %v239
    %v794 = vunpack.c.h.b16 %v239
    %v795 = vunpack.c.l.b16 %v240
    %v796 = vunpack.c.h.b16 %v240
    %v797 = vunpack.c.l.b16 %v241
    %v798 = vunpack.c.h.b16 %v241
    %v799 = vunpack.c.l.b16 %v242
    %v800 = vunpack.c.h.b16 %v242
    %v801 = vunpack.c.l.b16 %v243
    %v802 = vunpack.c.h.b16 %v243
    %v803 = vunpack.c.l.b16 %v244
    %v804 = vunpack.c.h.b16 %v244
    %v805 = vunpack.c.l.b16 %v245
    %v806 = vunpack.c.h.b16 %v245
    %v807 = vunpack.c.l.b16 %v246
    %v808 = vunpack.c.h.b16 %v246
    %v809 = vunpack.c.l.b16 %v247
    %v810 = vunpack.c.h.b16 %v247
    %v811 = vunpack.c.l.b16 %v248
    %v812 = vunpack.c.h.b16 %v248
    %v813 = vunpack.c.l.b16 %v249
    %v814 = vunpack.c.h.b16 %v249
    %v815 = vunpack.c.l.b16 %v250
    %v816 = vunpack.c.h.b16 %v250
    %v817 = vunpack.c.l.b16 %v251
    %v818 = vunpack.c.h.b16 %v251
    %v819 = vunpack.c.l.b16 %v252
    %v820 = vunpack.c.h.b16 %v252
    %v821 = vunpack.c.l.b16 %v253
    %v822 = vunpack.c.h.b16 %v253
    %v823 = vunpack.c.l.b16 %v254
    %v824 = vunpack.c.h.b16 %v254
    %v825 = vunpack.c.l.b16 %v255
    %v826 = vunpack.c.h.b16 %v255
    %v827 = vunpack.c.l.b16 %v256
    %v828 = vunpack.c.h.b16 %v256
    %v829 = vunpack.c.l.b16 %v257
    %v830 = vunpack.c.h.b16 %v257
    %v831 = vunpack.c.l.b16 %v258
    %v832 = vunpack.c.h.b16 %v258
    %v833 = vunpack.c.l.b16 %v259
    %v834 = vunpack.c.h.b16 %v259
    %v835 = vunpack.c.l.b16 %v260
    %v836 = vunpack.c.h.b16 %v260
    %v837 = vunpack.c.l.b16 %v261
    %v838 = vunpack.c.h.b16 %v261
    %v839 = vunpack.c.l.b16 %v262
    %v840 = vunpack.c.h.b16 %v262
    %v841 = vunpack.c.l.b16 %v263
    %v842 = vunpack.c.h.b16 %v263
    %v843 = vunpack.c.l.b16 %v264
    %v844 = vunpack.c.h.b16 %v264
    %v845 = vunpack.c.l.b16 %v265
    %v846 = vunpack.c.h.b16 %v265
    %v847 = vunpack.c.l.b16 %v266
    %v848 = vunpack.c.h.b16 %v266
    %v849 = vunpack.c.l.b16 %v267
    %v850 = vunpack.c.h.b16 %v267
    %v851 = vunpack.c.l.b16 %v268
    %v852 = vunpack.c.h.b16 %v268
    %v853 = vunpack.c.l.b16 %v269
    %v854 = vunpack.c.h.b16 %v269
    %v855 = vunpack.c.l.b16 %v270
    %v856 = vunpack.c.h.b16 %v270
    %v857 = vunpack.c.l.b16 %v271
    %v858 = vunpack.c.h.b16 %v271
    %v859 = vunpack.c.l.b16 %v272
    %v860 = vunpack.c.h.b16 %v272
    %v861 = vunpack.c.l.b16 %v273
    %v862 = vunpack.c.h.b16 %v273
    %v863 = vunpack.c.l.b16 %v274
    %v864 = vunpack.c.h.b16 %v274
    %v865 = vunpack.c.l.b16 %v275
    %v866 = vunpack.c.h.b16 %v275
    %v867 = vunpack.c.l.b16 %v276
    %v868 = vunpack.c.h.b16 %v276
    %v869 = vunpack.c.l.b16 %v277
    %v870 = vunpack.c.h.b16 %v277
    %v871 = vunpack.c.l.b16 %v278
    %v872 = vunpack.c.h.b16 %v278
    %v873 = vunpack.c.l.b16 %v279
    %v874 = vunpack.c.h.b16 %v279
    %v875 = vunpack.c.l.b16 %v280
    %v876 = vunpack.c.h.b16 %v280
    %v877 = vunpack.c.l.b16 %v281
    %v878 = vunpack.c.h.b16 %v281
    %v879 = vunpack.c.l.b16 %v282
    %v880 = vunpack.c.h.b16 %v282
    %v881 = vunpack.c.l.b16 %v283
    %v882 = vunpack.c.h.b16 %v283
    %v883 = vunpack.c.l.b16 %v284
    %v884 = vunpack.c.h.b16 %v284
    %v885 = vunpack.c.l.b16 %v285
    %v886 = vunpack.c.h.b16 %v285
    %v887 = vunpack.c.l.b16 %v286
    %v888 = vunpack.c.h.b16 %v286
    %v889 = vunpack.c.l.b16 %v287
    %v890 = vunpack.c.h.b16 %v287
    %v891 = vunpack.c.l.b16 %v288
    %v892 = vunpack.c.h.b16 %v288
    %v893 = vunpack.c.l.b16 %v289
    %v894 = vunpack.c.h.b16 %v289
    %v895 = vunpack.c.l.b16 %v290
    %v896 = vunpack.c.h.b16 %v290
    %v897 = vunpack.c.l.b16 %v291
    %v898 = vunpack.c.h.b16 %v291
    %v899 = vunpack.c.l.b16 %v292
    %v900 = vunpack.c.h.b16 %v292
    %v901 = vunpack.c.l.b16 %v293
    %v902 = vunpack.c.h.b16 %v293
    %v903 = vunpack.c.l.b16 %v294
    %v904 = vunpack.c.h.b16 %v294
    %v905 = vpack.c.b16 %v517, %v513
    %v906 = vpack.c.b16 %v518, %v514
    %v907 = vpack.c.b16 %v519, %v515
    %v908 = vpack.c.b16 %v520, %v516
    %v909 = vpack.c.b16 %v525, %v521
    %v910 = vpack.c.b16 %v526, %v522
    %v911 = vpack.c.b16 %v527, %v523
    %v912 = vpack.c.b16 %v528, %v524
    %v913 = vpack.c.b16 %v533, %v529
    %v914 = vpack.c.b16 %v534, %v530
    %v915 = vpack.c.b16 %v535, %v531
    %v916 = vpack.c.b16 %v536, %v532
    %v917 = vpack.c.b16 %v541, %v537
    %v918 = vpack.c.b16 %v542, %v538
    %v919 = vpack.c.b16 %v543, %v539
    %v920 = vpack.c.b16 %v544, %v540
    %v921 = vpack.c.b16 %v549, %v545
    %v922 = vpack.c.b16 %v550, %v546
    %v923 = vpack.c.b16 %v551, %v547
    %v924 = vpack.c.b16 %v552, %v548
    %v925 = vpack.c.b16 %v557, %v553
    %v926 = vpack.c.b16 %v558, %v554
    %v927 = vpack.c.b16 %v559, %v555
    %v928 = vpack.c.b16 %v560, %v556
    %v929 = vpack.c.b16 %v565, %v561
    %v930 = vpack.c.b16 %v566, %v562
    %v931 = vpack.c.b16 %v567, %v563
    %v932 = vpack.c.b16 %v568, %v564
    %v933 = vpack.c.b16 %v573, %v569
    %v934 = vpack.c.b16 %v574, %v570
    %v935 = vpack.c.b16 %v575, %v571
    %v936 = vpack.c.b16 %v576, %v572
    %v937 = vpack.c.b16 %v581, %v577
    %v938 = vpack.c.b16 %v582, %v578
    %v939 = vpack.c.b16 %v583, %v579
    %v940 = vpack.c.b16 %v584, %v580
    %v941 = vpack.c.b16 %v589, %v585
    %v942 = vpack.c.b16 %v590, %v586
    %v943 = vpack.c.b16 %v591, %v587
    %v944 = vpack.c.b16 %v592, %v588
    %v945 = vpack.c.b16 %v597, %v593
    %v946 = vpack.c.b16 %v598, %v594
    %v947 = vpack.c.b16 %v599, %v595
    %v948 = vpack.c.b16 %v600, %v596
    %v949 = vpack.c.b16 %v605, %v601
    %v950 = vpack.c.b16 %v606, %v602
    %v951 = vpack.c.b16 %v607, %v603
    %v952 = vpack.c.b16 %v608, %v604
    %v953 = vpack.c.b16 %v613, %v609
    %v954 = vpack.c.b16 %v614, %v610
    %v955 = vpack.c.b16 %v615, %v611
    %v956 = vpack.c.b16 %v616, %v612
    %v957 = vpack.c.b16 %v621, %v617
    %v958 = vpack.c.b16 %v622, %v618
    %v959 = vpack.c.b16 %v623, %v619
    %v960 = vpack.c.b16 %v624, %v620
    %v961 = vpack.c.b16 %v629, %v625
    %v962 = vpack.c.b16 %v630, %v626
    %v963 = vpack.c.b16 %v631, %v627
    %v964 = vpack.c.b16 %v632, %v628
    %v965 = vpack.c.b16 %v637, %v633
    %v966 = vpack.c.b16 %v638, %v634
    %v967 = vpack.c.b16 %v639, %v635
    %v968 = vpack.c.b16 %v640, %v636
    %v969 = vpack.c.b16 %v645, %v641
    %v970 = vpack.c.b16 %v646, %v642
    %v971 = vpack.c.b16 %v647, %v643
    %v972 = vpack.c.b16 %v648, %v644
    %v973 = vpack.c.b16 %v653, %v649
    %v974 = vpack.c.b16 %v654, %v650
    %v975 = vpack.c.b16 %v655, %v651
    %v976 = vpack.c.b16 %v656, %v652
    %v977 = vpack.c.b16 %v661, %v657
    %v978 = vpack.c.b16 %v662, %v658
    %v979 = vpack.c.b16 %v663, %v659
    %v980 = vpack.c.b16 %v664, %v660
    %v981 = vpack.c.b16 %v669, %v665
    %v982 = vpack.c.b16 %v670, %v666
    %v983 = vpack.c.b16 %v671, %v667
    %v984 = vpack.c.b16 %v672, %v668
    %v985 = vpack.c.b16 %v677, %v673
    %v986 = vpack.c.b16 %v678, %v674
    %v987 = vpack.c.b16 %v679, %v675
    %v988 = vpack.c.b16 %v680, %v676
    %v989 = vpack.c.b16 %v685, %v681
    %v990 = vpack.c.b16 %v686, %v682
    %v991 = vpack.c.b16 %v687, %v683
    %v992 = vpack.c.b16 %v688, %v684
    %v993 = vpack.c.b16 %v693, %v689
    %v994 = vpack.c.b16 %v694, %v690
    %v995 = vpack.c.b16 %v695, %v691
    %v996 = vpack.c.b16 %v696, %v692
    %v997 = vpack.c.b16 %v701, %v697
    %v998 = vpack.c.b16 %v702, %v698
    %v999 = vpack.c.b16 %v703, %v699
    %v1000 = vpack.c.b16 %v704, %v700
    %v1001 = vpack.c.b16 %v709, %v705
    %v1002 = vpack.c.b16 %v710, %v706
    %v1003 = vpack.c.b16 %v711, %v707
    %v1004 = vpack.c.b16 %v712, %v708
    %v1005 = vpack.c.b16 %v717, %v713
    %v1006 = vpack.c.b16 %v718, %v714
    %v1007 = vpack.c.b16 %v719, %v715
    %v1008 = vpack.c.b16 %v720, %v716
    %v1009 = vpack.c.b16 %v725, %v721
    %v1010 = vpack.c.b16 %v726, %v722
    %v1011 = vpack.c.b16 %v727, %v723
    %v1012 = vpack.c.b16 %v728, %v724
    %v1013 = vpack.c.b16 %v733, %v729
    %v1014 = vpack.c.b16 %v734, %v730
    %v1015 = vpack.c.b16 %v735, %v731
    %v1016 = vpack.c.b16 %v736, %v732
    %v1017 = vpack.c.b16 %v741, %v737
    %v1018 = vpack.c.b16 %v742, %v738
    %v1019 = vpack.c.b16 %v743, %v739
    %v1020 = vpack.c.b16 %v744, %v740
    %v1021 = vpack.c.b16 %v749, %v745
    %v1022 = vpack.c.b16 %v750, %v746
    %v1023 = vpack.c.b16 %v751, %v747
    %v1024 = vpack.c.b16 %v752, %v748
    %v1025 = vpack.c.b16 %v757, %v753
    %v1026 = vpack.c.b16 %v758, %v754
    %v1027 = vpack.c.b16 %v759, %v755
    %v1028 = vpack.c.b16 %v760, %v756
    %v1029 = vpack.c.b16 %v765, %v761
    %v1030 = vpack.c.b16 %v766, %v762
    %v1031 = vpack.c.b16 %v767, %v763
    %v1032 = vpack.c.b16 %v768, %v764
    %v1033 = vpack.c.b16 %v773, %v769
    %v1034 = vpack.c.b16 %v774, %v770
    %v1035 = vpack.c.b16 %v775, %v771
    %v1036 = vpack.c.b16 %v776, %v772
    %v1037 = vpack.c.b16 %v781, %v777
    %v1038 = vpack.c.b16 %v782, %v778
    %v1039 = vpack.c.b16 %v783, %v779
    %v1040 = vpack.c.b16 %v784, %v780
    %v1041 = vpack.c.b16 %v789, %v785
    %v1042 = vpack.c.b16 %v790, %v786
    %v1043 = vpack.c.b16 %v791, %v787
    %v1044 = vpack.c.b16 %v792, %v788
    %v1045 = vpack.c.b16 %v797, %v793
    %v1046 = vpack.c.b16 %v798, %v794
    %v1047 = vpack.c.b16 %v799, %v795
    %v1048 = vpack.c.b16 %v800, %v796
    %v1049 = vpack.c.b16 %v805, %v801
    %v1050 = vpack.c.b16 %v806, %v802
    %v1051 = vpack.c.b16 %v807, %v803
    %v1052 = vpack.c.b16 %v808, %v804
    %v1053 = vpack.c.b16 %v813, %v809
    %v1054 = vpack.c.b16 %v814, %v810
    %v1055 = vpack.c.b16 %v815, %v811
    %v1056 = vpack.c.b16 %v816, %v812
    %v1057 = vpack.c.b16 %v821, %v817
    %v1058 = vpack.c.b16 %v822, %v818
    %v1059 = vpack.c.b16 %v823, %v819
    %v1060 = vpack.c.b16 %v824, %v820
    %v1061 = vpack.c.b16 %v829, %v825
    %v1062 = vpack.c.b16 %v830, %v826
    %v1063 = vpack.c.b16 %v831, %v827
    %v1064 = vpack.c.b16 %v832, %v828
    %v1065 = vpack.c.b16 %v837, %v833
    %v1066 = vpack.c.b16 %v838, %v834
    %v1067 = vpack.c.b16 %v839, %v835
    %v1068 = vpack.c.b16 %v840, %v836
    %v1069 = vpack.c.b16 %v845, %v841
    %v1070 = vpack.c.b16 %v846, %v842
    %v1071 = vpack.c.b16 %v847, %v843
    %v1072 = vpack.c.b16 %v848, %v844
    %v1073 = vpack.c.b16 %v853, %v849
    %v1074 = vpack.c.b16 %v854, %v850
    %v1075 = vpack.c.b16 %v855, %v851
    %v1076 = vpack.c.b16 %v856, %v852
    %v1077 = vpack.c.b16 %v861, %v857
    %v1078 = vpack.c.b16 %v862, %v858
    %v1079 = vpack.c.b16 %v863, %v859
    %v1080 = vpack.c.b16 %v864, %v860
    %v1081 = vpack.c.b16 %v869, %v865
    %v1082 = vpack.c.b16 %v870, %v866
    %v1083 = vpack.c.b16 %v871, %v867
    %v1084 = vpack.c.b16 %v872, %v868
    %v1085 = vpack.c.b16 %v877, %v873
    %v1086 = vpack.c.b16 %v878, %v874
    %v1087 = vpack.c.b16 %v879, %v875
    %v1088 = vpack.c.b16 %v880, %v876
    %v1089 = vpack.c.b16 %v885, %v881
    %v1090 = vpack.c.b16 %v886, %v882
    %v1091 = vpack.c.b16 %v887, %v883
    %v1092 = vpack.c.b16 %v888, %v884
    %v1093 = vpack.c.b16 %v893, %v889
    %v1094 = vpack.c.b16 %v894, %v890
    %v1095 = vpack.c.b16 %v895, %v891
    %v1096 = vpack.c.b16 %v896, %v892
    %v1097 = vpack.c.b16 %v901, %v897
    %v1098 = vpack.c.b16 %v902, %v898
    %v1099 = vpack.c.b16 %v903, %v899
    %v1100 = vpack.c.b16 %v904, %v900
    %vm1297 = vcmask 130048
    %v1299 = vsel %vm1297, %v84, 0
    %v1302 = vsel %vm1297, %v91, 0
    %v1305 = vsel %vm1297, %v98, 0
    %1307 = vmatprep.subr.bf16.mxu0 %v906
    %1308 = vmatpush1.bf16.msra.mxu0 %v905
    %1309 = vmatprep.subr.bf16.mxu0 %v910
    %1310 = vmatpush1.bf16.msra.mxu0 %v909
    %1311 = vmatprep.subr.bf16.mxu0 %v914
    %1312 = vmatpush1.bf16.msra.mxu0 %v913
    %1313 = vmatprep.subr.bf16.mxu0 %v918
    %1314 = vmatpush1.bf16.msra.mxu0 %v917
    %1315 = vmatprep.subr.bf16.mxu0 %v922
    %1316 = vmatpush1.bf16.msra.mxu0 %v921
    %1317 = vmatprep.subr.bf16.mxu0 %v926
    %1318 = vmatpush1.bf16.msra.mxu0 %v925
    %1319 = vmatprep.subr.bf16.mxu0 %v930
    %1320 = vmatpush1.bf16.msra.mxu0 %v929
    %1321 = vmatprep.subr.bf16.mxu0 %v934
    %1322 = vmatpush1.bf16.msra.mxu0 %v933
    %1323 = vmatprep.subr.bf16.mxu0 %v938
    %1324 = vmatpush1.bf16.msra.mxu0 %v937
    %1325 = vmatprep.subr.bf16.mxu0 %v942
    %1326 = vmatpush1.bf16.msra.mxu0 %v941
    %1327 = vmatprep.subr.bf16.mxu0 %v946
    %1328 = vmatpush1.bf16.msra.mxu0 %v945
    %1329 = vmatprep.subr.bf16.mxu0 %v950
    %1330 = vmatpush1.bf16.msra.mxu0 %v949
    %1331 = vmatprep.subr.bf16.mxu0 %v954
    %1332 = vmatpush1.bf16.msra.mxu0 %v953
    %1333 = vmatprep.subr.bf16.mxu0 %v958
    %1334 = vmatpush1.bf16.msra.mxu0 %v957
    %1335 = vmatprep.subr.bf16.mxu0 %v962
    %1336 = vmatpush1.bf16.msra.mxu0 %v961
    %1337 = vmatprep.subr.bf16.mxu0 %v966
    %1338 = vmatpush1.bf16.msra.mxu0 %v965
    %1339 = vmatprep.mubr.bf16.mxu0 %v79
    %1340 = vmatmul.mubr.bf16.gmra.mrb[0].mxu0 %v78
    %v1341 = vpop.f32.mrb[0].mxu0
    %v1342 = vadd.f32 %v300, %v1341
    %v1343 = vpop.f32.mrb[0].mxu0
    %v1344 = vadd.f32 %v304, %v1343
    %v1345 = vpop.f32.mrb[0].mxu0
    %v1346 = vadd.f32 %v300, %v1345
    %v1347 = vpop.f32.mrb[0].mxu0
    %v1348 = vadd.f32 %v304, %v1347
    %1349 = vmatprep.mubr.bf16.mxu0 %v86
    %1350 = vmatmul.mubr.bf16.gmra.mrb[0].mxu0 %v85
    %v1351 = vpop.f32.mrb[0].mxu0
    %v1352 = vadd.f32 %v300, %v1351
    %v1353 = vpop.f32.mrb[0].mxu0
    %v1354 = vadd.f32 %v304, %v1353
    %v1355 = vpop.f32.mrb[0].mxu0
    %v1356 = vadd.f32 %v300, %v1355
    %v1357 = vpop.f32.mrb[0].mxu0
    %v1358 = vadd.f32 %v304, %v1357
    %1359 = vmatprep.mubr.bf16.mxu0 %v93
    %1360 = vmatmul.mubr.bf16.gmra.mrb[0].mxu0 %v92
    %v1361 = vpop.f32.mrb[0].mxu0
    %v1362 = vadd.f32 %v300, %v1361
    %v1363 = vpop.f32.mrb[0].mxu0
    %v1364 = vadd.f32 %v304, %v1363
    %v1365 = vpop.f32.mrb[0].mxu0
    %v1366 = vpop.f32.mrb[0].mxu0
    %1367 = vdwg.mxu0
    %1368 = vmatprep.subr.bf16.mxu0 %v970
    %1369 = vmatpush1.bf16.msra.mxu0 %v969
    %1370 = vmatprep.subr.bf16.mxu0 %v974
    %1371 = vmatpush1.bf16.msra.mxu0 %v973
    %1372 = vmatprep.subr.bf16.mxu0 %v978
    %1373 = vmatpush1.bf16.msra.mxu0 %v977
    %1374 = vmatprep.subr.bf16.mxu0 %v982
    %1375 = vmatpush1.bf16.msra.mxu0 %v981
    %1376 = vmatprep.subr.bf16.mxu0 %v986
    %1377 = vmatpush1.bf16.msra.mxu0 %v985
    %1378 = vmatprep.subr.bf16.mxu0 %v990
    %1379 = vmatpush1.bf16.msra.mxu0 %v989
    %1380 = vmatprep.subr.bf16.mxu0 %v994
    %1381 = vmatpush1.bf16.msra.mxu0 %v993
    %1382 = vmatprep.subr.bf16.mxu0 %v998
    %1383 = vmatpush1.bf16.msra.mxu0 %v997
    %1384 = vmatprep.subr.bf16.mxu0 %v1002
    %1385 = vmatpush1.bf16.msra.mxu0 %v1001
    %1386 = vmatprep.subr.bf16.mxu0 %v1006
    %1387 = vmatpush1.bf16.msra.mxu0 %v1005
    %1388 = vmatprep.subr.bf16.mxu0 %v1010
    %1389 = vmatpush1.bf16.msra.mxu0 %v1009
    %1390 = vmatprep.subr.bf16.mxu0 %v1014
    %1391 = vmatpush1.bf16.msra.mxu0 %v1013
    %1392 = vmatprep.subr.bf16.mxu0 %v1018
    %1393 = vmatpush1.bf16.msra.mxu0 %v1017
    %1394 = vmatprep.subr.bf16.mxu0 %v1022
    %1395 = vmatpush1.bf16.msra.mxu0 %v1021
    %1396 = vmatprep.subr.bf16.mxu0 %v1026
    %1397 = vmatpush1.bf16.msra.mxu0 %v1025
    %1398 = vmatprep.subr.bf16.mxu0 %v1030
    %1399 = vmatpush1.bf16.msra.mxu0 %v1029
    %1400 = vmatprep.mubr.bf16.mxu0 %v81
    %1401 = vmatmul.mubr.bf16.gmra.mrb[0].mxu0 %v80
    %v1402 = vpop.f32.mrb[0].mxu0
    %v1403 = vadd.f32 %v1342, %v1402
    %v1404 = vpop.f32.mrb[0].mxu0
    %v1405 = vadd.f32 %v1344, %v1404
    %v1406 = vpop.f32.mrb[0].mxu0
    %v1407 = vadd.f32 %v1346, %v1406
    %v1408 = vpop.f32.mrb[0].mxu0
    %v1409 = vadd.f32 %v1348, %v1408
    %1410 = vmatprep.mubr.bf16.mxu0 %v88
    %1411 = vmatmul.mubr.bf16.gmra.mrb[0].mxu0 %v87
    %v1412 = vpop.f32.mrb[0].mxu0
    %v1413 = vadd.f32 %v1352, %v1412
    %v1414 = vpop.f32.mrb[0].mxu0
    %v1415 = vadd.f32 %v1354, %v1414
    %v1416 = vpop.f32.mrb[0].mxu0
    %v1417 = vadd.f32 %v1356, %v1416
    %v1418 = vpop.f32.mrb[0].mxu0
    %v1419 = vadd.f32 %v1358, %v1418
    %1420 = vmatprep.mubr.bf16.mxu0 %v95
    %1421 = vmatmul.mubr.bf16.gmra.mrb[0].mxu0 %v94
    %v1422 = vpop.f32.mrb[0].mxu0
    %v1423 = vadd.f32 %v1362, %v1422
    %v1424 = vpop.f32.mrb[0].mxu0
    %v1425 = vadd.f32 %v1364, %v1424
    %v1426 = vpop.f32.mrb[0].mxu0
    %v1427 = vpop.f32.mrb[0].mxu0
    %1428 = vdwg.mxu0
    %1429 = vmatprep.subr.bf16.mxu0 %v1034
    %1430 = vmatpush1.bf16.msra.mxu0 %v1033
    %1431 = vmatprep.subr.bf16.mxu0 %v1038
    %1432 = vmatpush1.bf16.msra.mxu0 %v1037
    %1433 = vmatprep.subr.bf16.mxu0 %v1042
    %1434 = vmatpush1.bf16.msra.mxu0 %v1041
    %1435 = vmatprep.subr.bf16.mxu0 %v1046
    %1436 = vmatpush1.bf16.msra.mxu0 %v1045
    %1437 = vmatprep.subr.bf16.mxu0 %v1050
    %1438 = vmatpush1.bf16.msra.mxu0 %v1049
    %1439 = vmatprep.subr.bf16.mxu0 %v1054
    %1440 = vmatpush1.bf16.msra.mxu0 %v1053
    %1441 = vmatprep.subr.bf16.mxu0 %v1058
    %1442 = vmatpush1.bf16.msra.mxu0 %v1057
    %1443 = vmatprep.subr.bf16.mxu0 %v1062
    %1444 = vmatpush1.bf16.msra.mxu0 %v1061
    %1445 = vmatprep.subr.bf16.mxu0 %v1066
    %1446 = vmatpush1.bf16.msra.mxu0 %v1065
    %1447 = vmatprep.subr.bf16.mxu0 %v1070
    %1448 = vmatpush1.bf16.msra.mxu0 %v1069
    %1449 = vmatprep.subr.bf16.mxu0 %v1074
    %1450 = vmatpush1.bf16.msra.mxu0 %v1073
    %1451 = vmatprep.subr.bf16.mxu0 %v1078
    %1452 = vmatpush1.bf16.msra.mxu0 %v1077
    %1453 = vmatprep.subr.bf16.mxu0 %v1082
    %1454 = vmatpush1.bf16.msra.mxu0 %v1081
    %1455 = vmatprep.subr.bf16.mxu0 %v1086
    %1456 = vmatpush1.bf16.msra.mxu0 %v1085
    %1457 = vmatprep.subr.bf16.mxu0 %v1090
    %1458 = vmatpush1.bf16.msra.mxu0 %v1089
    %1459 = vmatprep.subr.bf16.mxu0 %v1094
    %1460 = vmatpush1.bf16.msra.mxu0 %v1093
    %1461 = vmatprep.mubr.bf16.mxu0 %v83
    %1462 = vmatmul.mubr.bf16.gmra.mrb[0].mxu0 %v82
    %v1463 = vpop.f32.mrb[0].mxu0
    %v1464 = vadd.f32 %v1403, %v1463
    %v1465 = vpop.f32.mrb[0].mxu0
    %v1466 = vadd.f32 %v1405, %v1465
    %v1467 = vpop.f32.mrb[0].mxu0
    %v1468 = vadd.f32 %v1407, %v1467
    %v1469 = vpop.f32.mrb[0].mxu0
    %v1470 = vadd.f32 %v1409, %v1469
    %1471 = vmatprep.mubr.bf16.mxu0 %v90
    %1472 = vmatmul.mubr.bf16.gmra.mrb[0].mxu0 %v89
    %v1473 = vpop.f32.mrb[0].mxu0
    %v1474 = vadd.f32 %v1413, %v1473
    %v1475 = vpop.f32.mrb[0].mxu0
    %v1476 = vadd.f32 %v1415, %v1475
    %v1477 = vpop.f32.mrb[0].mxu0
    %v1478 = vadd.f32 %v1417, %v1477
    %v1479 = vpop.f32.mrb[0].mxu0
    %v1480 = vadd.f32 %v1419, %v1479
    %1481 = vmatprep.mubr.bf16.mxu0 %v97
    %1482 = vmatmul.mubr.bf16.gmra.mrb[0].mxu0 %v96
    %v1483 = vpop.f32.mrb[0].mxu0
    %v1484 = vadd.f32 %v1423, %v1483
    %v1485 = vpop.f32.mrb[0].mxu0
    %v1486 = vadd.f32 %v1425, %v1485
    %v1487 = vpop.f32.mrb[0].mxu0
    %v1488 = vpop.f32.mrb[0].mxu0
    %1489 = vdwg.mxu0
    %1490 = vmatprep.subr.bf16.mxu0 %v1098
    %1491 = vmatpush1.bf16.msra.mxu0 %v1097
    %1492 = vmatprep.subr.bf16.mxu0 0
    %1493 = vmatpush1.bf16.msra.mxu0 0
    %1494 = vmatprep.subr.bf16.mxu0 0
    %1495 = vmatpush1.bf16.msra.mxu0 0
    %1496 = vmatprep.subr.bf16.mxu0 0
    %1497 = vmatpush1.bf16.msra.mxu0 0
    %1498 = vmatprep.subr.bf16.mxu0 0
    %1499 = vmatpush1.bf16.msra.mxu0 0
    %1500 = vmatprep.subr.bf16.mxu0 0
    %1501 = vmatpush1.bf16.msra.mxu0 0
    %1502 = vmatprep.subr.bf16.mxu0 0
    %1503 = vmatpush1.bf16.msra.mxu0 0
    %1504 = vmatprep.subr.bf16.mxu0 0
    %1505 = vmatpush1.bf16.msra.mxu0 0
    %1506 = vmatprep.subr.bf16.mxu0 0
    %1507 = vmatpush1.bf16.msra.mxu0 0
    %1508 = vmatprep.subr.bf16.mxu0 0
    %1509 = vmatpush1.bf16.msra.mxu0 0
    %1510 = vmatprep.subr.bf16.mxu0 0
    %1511 = vmatpush1.bf16.msra.mxu0 0
    %1512 = vmatprep.subr.bf16.mxu0 0
    %1513 = vmatpush1.bf16.msra.mxu0 0
    %1514 = vmatprep.subr.bf16.mxu0 0
    %1515 = vmatpush1.bf16.msra.mxu0 0
    %1516 = vmatprep.subr.bf16.mxu0 0
    %1517 = vmatpush1.bf16.msra.mxu0 0
    %1518 = vmatprep.subr.bf16.mxu0 0
    %1519 = vmatpush1.bf16.msra.mxu0 0
    %1520 = vmatprep.subr.bf16.mxu0 0
    %1521 = vmatpush1.bf16.msra.mxu0 0
    %1522 = vmatprep.mubr.bf16.mxu0 0
    %1523 = vmatmul.mubr.bf16.gmra.mrb[0].mxu0 %v1299
    %v1524 = vpop.f32.mrb[0].mxu0
    %v1525 = vadd.f32 %v1464, %v1524
    %v1526 = vpop.f32.mrb[0].mxu0
    %v1527 = vadd.f32 %v1466, %v1526
    %v1528 = vpop.f32.mrb[0].mxu0
    %v1529 = vadd.f32 %v1468, %v1528
    %v1530 = vpop.f32.mrb[0].mxu0
    %v1531 = vadd.f32 %v1470, %v1530
    %1532 = vmatprep.mubr.bf16.mxu0 0
    %1533 = vmatmul.mubr.bf16.gmra.mrb[0].mxu0 %v1302
    %v1534 = vpop.f32.mrb[0].mxu0
    %v1535 = vadd.f32 %v1474, %v1534
    %v1536 = vpop.f32.mrb[0].mxu0
    %v1537 = vadd.f32 %v1476, %v1536
    %v1538 = vpop.f32.mrb[0].mxu0
    %v1539 = vadd.f32 %v1478, %v1538
    %v1540 = vpop.f32.mrb[0].mxu0
    %v1541 = vadd.f32 %v1480, %v1540
    %1542 = vmatprep.mubr.bf16.mxu0 0
    %1543 = vmatmul.mubr.bf16.gmra.mrb[0].mxu0 %v1305
    %v1544 = vpop.f32.mrb[0].mxu0
    %v1545 = vadd.f32 %v1484, %v1544
    %v1546 = vpop.f32.mrb[0].mxu0
    %v1547 = vadd.f32 %v1486, %v1546
    %v1548 = vpop.f32.mrb[0].mxu0
    %v1549 = vpop.f32.mrb[0].mxu0
    %1550 = vdwg.mxu0
    %1551 = vmatprep.subr.bf16.mxu0 %v908
    %1552 = vmatpush1.bf16.msra.mxu0 %v907
    %1553 = vmatprep.subr.bf16.mxu0 %v912
    %1554 = vmatpush1.bf16.msra.mxu0 %v911
    %1555 = vmatprep.subr.bf16.mxu0 %v916
    %1556 = vmatpush1.bf16.msra.mxu0 %v915
    %1557 = vmatprep.subr.bf16.mxu0 %v920
    %1558 = vmatpush1.bf16.msra.mxu0 %v919
    %1559 = vmatprep.subr.bf16.mxu0 %v924
    %1560 = vmatpush1.bf16.msra.mxu0 %v923
    %1561 = vmatprep.subr.bf16.mxu0 %v928
    %1562 = vmatpush1.bf16.msra.mxu0 %v927
    %1563 = vmatprep.subr.bf16.mxu0 %v932
    %1564 = vmatpush1.bf16.msra.mxu0 %v931
    %1565 = vmatprep.subr.bf16.mxu0 %v936
    %1566 = vmatpush1.bf16.msra.mxu0 %v935
    %1567 = vmatprep.subr.bf16.mxu0 %v940
    %1568 = vmatpush1.bf16.msra.mxu0 %v939
    %1569 = vmatprep.subr.bf16.mxu0 %v944
    %1570 = vmatpush1.bf16.msra.mxu0 %v943
    %1571 = vmatprep.subr.bf16.mxu0 %v948
    %1572 = vmatpush1.bf16.msra.mxu0 %v947
    %1573 = vmatprep.subr.bf16.mxu0 %v952
    %1574 = vmatpush1.bf16.msra.mxu0 %v951
    %1575 = vmatprep.subr.bf16.mxu0 %v956
    %1576 = vmatpush1.bf16.msra.mxu0 %v955
    %1577 = vmatprep.subr.bf16.mxu0 %v960
    %1578 = vmatpush1.bf16.msra.mxu0 %v959
    %1579 = vmatprep.subr.bf16.mxu0 %v964
    %1580 = vmatpush1.bf16.msra.mxu0 %v963
    %1581 = vmatprep.subr.bf16.mxu0 %v968
    %1582 = vmatpush1.bf16.msra.mxu0 %v967
    %1583 = vmatprep.mubr.bf16.mxu0 %v79
    %1584 = vmatmul.mubr.bf16.gmra.mrb[0].mxu0 %v78
    %v1585 = vpop.f32.mrb[0].mxu0
    %v1586 = vadd.f32 %v308, %v1585
    %v1587 = vpop.f32.mrb[0].mxu0
    %v1588 = vadd.f32 %v312, %v1587
    %v1589 = vpop.f32.mrb[0].mxu0
    %v1590 = vadd.f32 %v308, %v1589
    %v1591 = vpop.f32.mrb[0].mxu0
    %v1592 = vadd.f32 %v312, %v1591
    %1593 = vmatprep.mubr.bf16.mxu0 %v86
    %1594 = vmatmul.mubr.bf16.gmra.mrb[0].mxu0 %v85
    %v1595 = vpop.f32.mrb[0].mxu0
    %v1596 = vadd.f32 %v308, %v1595
    %v1597 = vpop.f32.mrb[0].mxu0
    %v1598 = vadd.f32 %v312, %v1597
    %v1599 = vpop.f32.mrb[0].mxu0
    %v1600 = vadd.f32 %v308, %v1599
    %v1601 = vpop.f32.mrb[0].mxu0
    %v1602 = vadd.f32 %v312, %v1601
    %1603 = vmatprep.mubr.bf16.mxu0 %v93
    %1604 = vmatmul.mubr.bf16.gmra.mrb[0].mxu0 %v92
    %v1605 = vpop.f32.mrb[0].mxu0
    %v1606 = vadd.f32 %v308, %v1605
    %v1607 = vpop.f32.mrb[0].mxu0
    %v1608 = vadd.f32 %v312, %v1607
    %v1609 = vpop.f32.mrb[0].mxu0
    %v1610 = vpop.f32.mrb[0].mxu0
    %1611 = vdwg.mxu0
    %1612 = vmatprep.subr.bf16.mxu0 %v972
    %1613 = vmatpush1.bf16.msra.mxu0 %v971
    %1614 = vmatprep.subr.bf16.mxu0 %v976
    %1615 = vmatpush1.bf16.msra.mxu0 %v975
    %1616 = vmatprep.subr.bf16.mxu0 %v980
    %1617 = vmatpush1.bf16.msra.mxu0 %v979
    %1618 = vmatprep.subr.bf16.mxu0 %v984
    %1619 = vmatpush1.bf16.msra.mxu0 %v983
    %1620 = vmatprep.subr.bf16.mxu0 %v988
    %1621 = vmatpush1.bf16.msra.mxu0 %v987
    %1622 = vmatprep.subr.bf16.mxu0 %v992
    %1623 = vmatpush1.bf16.msra.mxu0 %v991
    %1624 = vmatprep.subr.bf16.mxu0 %v996
    %1625 = vmatpush1.bf16.msra.mxu0 %v995
    %1626 = vmatprep.subr.bf16.mxu0 %v1000
    %1627 = vmatpush1.bf16.msra.mxu0 %v999
    %1628 = vmatprep.subr.bf16.mxu0 %v1004
    %1629 = vmatpush1.bf16.msra.mxu0 %v1003
    %1630 = vmatprep.subr.bf16.mxu0 %v1008
    %1631 = vmatpush1.bf16.msra.mxu0 %v1007
    %1632 = vmatprep.subr.bf16.mxu0 %v1012
    %1633 = vmatpush1.bf16.msra.mxu0 %v1011
    %1634 = vmatprep.subr.bf16.mxu0 %v1016
    %1635 = vmatpush1.bf16.msra.mxu0 %v1015
    %1636 = vmatprep.subr.bf16.mxu0 %v1020
    %1637 = vmatpush1.bf16.msra.mxu0 %v1019
    %1638 = vmatprep.subr.bf16.mxu0 %v1024
    %1639 = vmatpush1.bf16.msra.mxu0 %v1023
    %1640 = vmatprep.subr.bf16.mxu0 %v1028
    %1641 = vmatpush1.bf16.msra.mxu0 %v1027
    %1642 = vmatprep.subr.bf16.mxu0 %v1032
    %1643 = vmatpush1.bf16.msra.mxu0 %v1031
    %1644 = vmatprep.mubr.bf16.mxu0 %v81
    %1645 = vmatmul.mubr.bf16.gmra.mrb[0].mxu0 %v80
    %v1646 = vpop.f32.mrb[0].mxu0
    %v1647 = vadd.f32 %v1586, %v1646
    %v1648 = vpop.f32.mrb[0].mxu0
    %v1649 = vadd.f32 %v1588, %v1648
    %v1650 = vpop.f32.mrb[0].mxu0
    %v1651 = vadd.f32 %v1590, %v1650
    %v1652 = vpop.f32.mrb[0].mxu0
    %v1653 = vadd.f32 %v1592, %v1652
    %1654 = vmatprep.mubr.bf16.mxu0 %v88
    %1655 = vmatmul.mubr.bf16.gmra.mrb[0].mxu0 %v87
    %v1656 = vpop.f32.mrb[0].mxu0
    %v1657 = vadd.f32 %v1596, %v1656
    %v1658 = vpop.f32.mrb[0].mxu0
    %v1659 = vadd.f32 %v1598, %v1658
    %v1660 = vpop.f32.mrb[0].mxu0
    %v1661 = vadd.f32 %v1600, %v1660
    %v1662 = vpop.f32.mrb[0].mxu0
    %v1663 = vadd.f32 %v1602, %v1662
    %1664 = vmatprep.mubr.bf16.mxu0 %v95
    %1665 = vmatmul.mubr.bf16.gmra.mrb[0].mxu0 %v94
    %v1666 = vpop.f32.mrb[0].mxu0
    %v1667 = vadd.f32 %v1606, %v1666
    %v1668 = vpop.f32.mrb[0].mxu0
    %v1669 = vadd.f32 %v1608, %v1668
    %v1670 = vpop.f32.mrb[0].mxu0
    %v1671 = vpop.f32.mrb[0].mxu0
    %1672 = vdwg.mxu0
    %1673 = vmatprep.subr.bf16.mxu0 %v1036
    %1674 = vmatpush1.bf16.msra.mxu0 %v1035
    %1675 = vmatprep.subr.bf16.mxu0 %v1040
    %1676 = vmatpush1.bf16.msra.mxu0 %v1039
    %1677 = vmatprep.subr.bf16.mxu0 %v1044
    %1678 = vmatpush1.bf16.msra.mxu0 %v1043
    %1679 = vmatprep.subr.bf16.mxu0 %v1048
    %1680 = vmatpush1.bf16.msra.mxu0 %v1047
    %1681 = vmatprep.subr.bf16.mxu0 %v1052
    %1682 = vmatpush1.bf16.msra.mxu0 %v1051
    %1683 = vmatprep.subr.bf16.mxu0 %v1056
    %1684 = vmatpush1.bf16.msra.mxu0 %v1055
    %1685 = vmatprep.subr.bf16.mxu0 %v1060
    %1686 = vmatpush1.bf16.msra.mxu0 %v1059
    %1687 = vmatprep.subr.bf16.mxu0 %v1064
    %1688 = vmatpush1.bf16.msra.mxu0 %v1063
    %1689 = vmatprep.subr.bf16.mxu0 %v1068
    %1690 = vmatpush1.bf16.msra.mxu0 %v1067
    %1691 = vmatprep.subr.bf16.mxu0 %v1072
    %1692 = vmatpush1.bf16.msra.mxu0 %v1071
    %1693 = vmatprep.subr.bf16.mxu0 %v1076
    %1694 = vmatpush1.bf16.msra.mxu0 %v1075
    %1695 = vmatprep.subr.bf16.mxu0 %v1080
    %1696 = vmatpush1.bf16.msra.mxu0 %v1079
    %1697 = vmatprep.subr.bf16.mxu0 %v1084
    %1698 = vmatpush1.bf16.msra.mxu0 %v1083
    %1699 = vmatprep.subr.bf16.mxu0 %v1088
    %1700 = vmatpush1.bf16.msra.mxu0 %v1087
    %1701 = vmatprep.subr.bf16.mxu0 %v1092
    %1702 = vmatpush1.bf16.msra.mxu0 %v1091
    %1703 = vmatprep.subr.bf16.mxu0 %v1096
    %1704 = vmatpush1.bf16.msra.mxu0 %v1095
    %1705 = vmatprep.mubr.bf16.mxu0 %v83
    %1706 = vmatmul.mubr.bf16.gmra.mrb[0].mxu0 %v82
    %v1707 = vpop.f32.mrb[0].mxu0
    %v1708 = vadd.f32 %v1647, %v1707
    %v1709 = vpop.f32.mrb[0].mxu0
    %v1710 = vadd.f32 %v1649, %v1709
    %v1711 = vpop.f32.mrb[0].mxu0
    %v1712 = vadd.f32 %v1651, %v1711
    %v1713 = vpop.f32.mrb[0].mxu0
    %v1714 = vadd.f32 %v1653, %v1713
    %1715 = vmatprep.mubr.bf16.mxu0 %v90
    %1716 = vmatmul.mubr.bf16.gmra.mrb[0].mxu0 %v89
    %v1717 = vpop.f32.mrb[0].mxu0
    %v1718 = vadd.f32 %v1657, %v1717
    %v1719 = vpop.f32.mrb[0].mxu0
    %v1720 = vadd.f32 %v1659, %v1719
    %v1721 = vpop.f32.mrb[0].mxu0
    %v1722 = vadd.f32 %v1661, %v1721
    %v1723 = vpop.f32.mrb[0].mxu0
    %v1724 = vadd.f32 %v1663, %v1723
    %1725 = vmatprep.mubr.bf16.mxu0 %v97
    %1726 = vmatmul.mubr.bf16.gmra.mrb[0].mxu0 %v96
    %v1727 = vpop.f32.mrb[0].mxu0
    %v1728 = vadd.f32 %v1667, %v1727
    %v1729 = vpop.f32.mrb[0].mxu0
    %v1730 = vadd.f32 %v1669, %v1729
    %v1731 = vpop.f32.mrb[0].mxu0
    %v1732 = vpop.f32.mrb[0].mxu0
    %1733 = vdwg.mxu0
    %1734 = vmatprep.subr.bf16.mxu0 %v1100
    %1735 = vmatpush1.bf16.msra.mxu0 %v1099
    %1736 = vmatprep.subr.bf16.mxu0 0
    %1737 = vmatpush1.bf16.msra.mxu0 0
    %1738 = vmatprep.subr.bf16.mxu0 0
    %1739 = vmatpush1.bf16.msra.mxu0 0
    %1740 = vmatprep.subr.bf16.mxu0 0
    %1741 = vmatpush1.bf16.msra.mxu0 0
    %1742 = vmatprep.subr.bf16.mxu0 0
    %1743 = vmatpush1.bf16.msra.mxu0 0
    %1744 = vmatprep.subr.bf16.mxu0 0
    %1745 = vmatpush1.bf16.msra.mxu0 0
    %1746 = vmatprep.subr.bf16.mxu0 0
    %1747 = vmatpush1.bf16.msra.mxu0 0
    %1748 = vmatprep.subr.bf16.mxu0 0
    %1749 = vmatpush1.bf16.msra.mxu0 0
    %1750 = vmatprep.subr.bf16.mxu0 0
    %1751 = vmatpush1.bf16.msra.mxu0 0
    %1752 = vmatprep.subr.bf16.mxu0 0
    %1753 = vmatpush1.bf16.msra.mxu0 0
    %1754 = vmatprep.subr.bf16.mxu0 0
    %1755 = vmatpush1.bf16.msra.mxu0 0
    %1756 = vmatprep.subr.bf16.mxu0 0
    %1757 = vmatpush1.bf16.msra.mxu0 0
    %1758 = vmatprep.subr.bf16.mxu0 0
    %1759 = vmatpush1.bf16.msra.mxu0 0
    %1760 = vmatprep.subr.bf16.mxu0 0
    %1761 = vmatpush1.bf16.msra.mxu0 0
    %1762 = vmatprep.subr.bf16.mxu0 0
    %1763 = vmatpush1.bf16.msra.mxu0 0
    %1764 = vmatprep.subr.bf16.mxu0 0
    %1765 = vmatpush1.bf16.msra.mxu0 0
    %1766 = vmatprep.mubr.bf16.mxu0 0
    %1767 = vmatmul.mubr.bf16.gmra.mrb[0].mxu0 %v1299
    %v1768 = vpop.f32.mrb[0].mxu0
    %v1769 = vadd.f32 %v1708, %v1768
    %v1770 = vpop.f32.mrb[0].mxu0
    %v1771 = vadd.f32 %v1710, %v1770
    %v1772 = vpop.f32.mrb[0].mxu0
    %v1773 = vadd.f32 %v1712, %v1772
    %v1774 = vpop.f32.mrb[0].mxu0
    %v1775 = vadd.f32 %v1714, %v1774
    %1776 = vmatprep.mubr.bf16.mxu0 0
    %1777 = vmatmul.mubr.bf16.gmra.mrb[0].mxu0 %v1302
    %v1778 = vpop.f32.mrb[0].mxu0
    %v1779 = vadd.f32 %v1718, %v1778
    %v1780 = vpop.f32.mrb[0].mxu0
    %v1781 = vadd.f32 %v1720, %v1780
    %v1782 = vpop.f32.mrb[0].mxu0
    %v1783 = vadd.f32 %v1722, %v1782
    %v1784 = vpop.f32.mrb[0].mxu0
    %v1785 = vadd.f32 %v1724, %v1784
    %1786 = vmatprep.mubr.bf16.mxu0 0
    %1787 = vmatmul.mubr.bf16.gmra.mrb[0].mxu0 %v1305
    %v1788 = vpop.f32.mrb[0].mxu0
    %v1789 = vadd.f32 %v1728, %v1788
    %v1790 = vpop.f32.mrb[0].mxu0
    %v1791 = vadd.f32 %v1730, %v1790
    %v1792 = vpop.f32.mrb[0].mxu0
    %v1793 = vpop.f32.mrb[0].mxu0
    %1794 = vdwg.mxu0
    %vm1795 = vcmp.gt.f32.partialorder %v1525, 0.0
    %vm1796 = vcmp.gt.f32.partialorder %v1527, 0.0
    %vm1797 = vcmp.gt.f32.partialorder %v1769, 0.0
    %vm1798 = vcmp.gt.f32.partialorder %v1771, 0.0
    %vm1799 = vcmp.gt.f32.partialorder %v1529, 0.0
    %vm1800 = vcmp.gt.f32.partialorder %v1531, 0.0
    %vm1801 = vcmp.gt.f32.partialorder %v1773, 0.0
    %vm1802 = vcmp.gt.f32.partialorder %v1775, 0.0
    %vm1803 = vcmp.gt.f32.partialorder %v1535, 0.0
    %vm1804 = vcmp.gt.f32.partialorder %v1537, 0.0
    %vm1805 = vcmp.gt.f32.partialorder %v1779, 0.0
    %vm1806 = vcmp.gt.f32.partialorder %v1781, 0.0
    %vm1807 = vcmp.gt.f32.partialorder %v1539, 0.0
    %vm1808 = vcmp.gt.f32.partialorder %v1541, 0.0
    %vm1809 = vcmp.gt.f32.partialorder %v1783, 0.0
    %vm1810 = vcmp.gt.f32.partialorder %v1785, 0.0
    %vm1811 = vcmp.gt.f32.partialorder %v1545, 0.0
    %vm1812 = vcmp.gt.f32.partialorder %v1547, 0.0
    %vm1813 = vcmp.gt.f32.partialorder %v1789, 0.0
    %vm1814 = vcmp.gt.f32.partialorder %v1791, 0.0
    %v1815 = vmul.f32 %v1525, 0.2
    %v1816 = vmul.f32 %v1527, 0.2
    %v1817 = vmul.f32 %v1769, 0.2
    %v1818 = vmul.f32 %v1771, 0.2
    %v1819 = vmul.f32 %v1529, 0.2
    %v1820 = vmul.f32 %v1531, 0.2
    %v1821 = vmul.f32 %v1773, 0.2
    %v1822 = vmul.f32 %v1775, 0.2
    %v1823 = vmul.f32 %v1535, 0.2
    %v1824 = vmul.f32 %v1537, 0.2
    %v1825 = vmul.f32 %v1779, 0.2
    %v1826 = vmul.f32 %v1781, 0.2
    %v1827 = vmul.f32 %v1539, 0.2
    %v1828 = vmul.f32 %v1541, 0.2
    %v1829 = vmul.f32 %v1783, 0.2
    %v1830 = vmul.f32 %v1785, 0.2
    %v1831 = vmul.f32 %v1545, 0.2
    %v1832 = vmul.f32 %v1547, 0.2
    %v1833 = vmul.f32 %v1789, 0.2
    %v1834 = vmul.f32 %v1791, 0.2
    %v1835 = vsel %vm1795, %v1525, %v1815
    %v1836 = vsel %vm1796, %v1527, %v1816
    %v1837 = vsel %vm1797, %v1769, %v1817
    %v1838 = vsel %vm1798, %v1771, %v1818
    %v1839 = vsel %vm1799, %v1529, %v1819
    %v1840 = vsel %vm1800, %v1531, %v1820
    %v1841 = vsel %vm1801, %v1773, %v1821
    %v1842 = vsel %vm1802, %v1775, %v1822
    %v1843 = vsel %vm1803, %v1535, %v1823
    %v1844 = vsel %vm1804, %v1537, %v1824
    %v1845 = vsel %vm1805, %v1779, %v1825
    %v1846 = vsel %vm1806, %v1781, %v1826
    %v1847 = vsel %vm1807, %v1539, %v1827
    %v1848 = vsel %vm1808, %v1541, %v1828
    %v1849 = vsel %vm1809, %v1783, %v1829
    %v1850 = vsel %vm1810, %v1785, %v1830
    %v1851 = vsel %vm1811, %v1545, %v1831
    %v1852 = vsel %vm1812, %v1547, %v1832
    %v1853 = vsel %vm1813, %v1789, %v1833
    %v1854 = vsel %vm1814, %v1791, %v1834
    %v1855 = vpack.c.bf16 %v1839, %v1835
    %v1856 = vpack.c.bf16 %v1840, %v1836
    %v1857 = vpack.c.bf16 %v1841, %v1837
    %v1858 = vpack.c.bf16 %v1842, %v1838
    %v1859 = vpack.c.bf16 %v1847, %v1843
    %v1860 = vpack.c.bf16 %v1848, %v1844
    %v1861 = vpack.c.bf16 %v1849, %v1845
    %v1862 = vpack.c.bf16 %v1850, %v1846
    %v1863 = vpack.c.bf16 %v1851, %v1851
    %v1864 = vpack.c.bf16 %v1852, %v1852
    %v1865 = vpack.c.bf16 %v1853, %v1853
    %v1866 = vpack.c.bf16 %v1854, %v1854
    %v1867 = vld [vmem:[%s3] sm:$0xff]
    %v1868 = vld [vmem:[%s3 + $0x8] sm:$0xff]
    %v1869 = vld [vmem:[%s3 + $0x10] sm:$0xff]
    %v1870 = vld [vmem:[%s3 + $0x18] sm:$0xff]
    %v1871 = vld [vmem:[%s3 + $0x20] sm:$0xff]
    %v1872 = vld [vmem:[%s3 + $0x28] sm:$0xff]
    %v1873 = vld [vmem:[%s3 + $0x30] sm:$0xff]
    %v1874 = vld [vmem:[%s3 + $0x38] sm:$0xff]
    %v1875 = vld [vmem:[%s3 + $0x40] sm:$0xff]
    %v1876 = vld [vmem:[%s3 + $0x48] sm:$0xff]
    %v1877 = vld [vmem:[%s3 + $0x50] sm:$0xff]
    %v1878 = vld [vmem:[%s3 + $0x58] sm:$0xff]
    %v1879 = vld [vmem:[%s3 + $0x60] sm:$0xff]
    %v1880 = vld [vmem:[%s3 + $0x68] sm:$0xff]
    %v1881 = vld [vmem:[%s3 + $0x70] sm:$0xff]
    %v1882 = vld [vmem:[%s3 + $0x78] sm:$0xff]
    %v1883 = vld [vmem:[%s3 + $0x80] sm:$0xff]
    %v1884 = vld [vmem:[%s3 + $0x88] sm:$0xff]
    %v1885 = vld [vmem:[%s3 + $0x90] sm:$0xff]
    %v1886 = vld [vmem:[%s3 + $0x98] sm:$0xff]
    %v1887 = vld [vmem:[%s3 + $0xa0] sm:$0xff]
    %v1888 = vld [vmem:[%s3 + $0xa8] sm:$0xff]
    %v1889 = vld [vmem:[%s3 + $0xb0] sm:$0xff]
    %v1890 = vld [vmem:[%s3 + $0xb8] sm:$0xff]
    %v1891 = vld [vmem:[%s3 + $0xc0] sm:$0xff]
    %v1892 = vld [vmem:[%s3 + $0xc8] sm:$0xff]
    %v1893 = vld [vmem:[%s3 + $0xd0] sm:$0xff]
    %v1894 = vld [vmem:[%s3 + $0xd8] sm:$0xff]
    %v1895 = vld [vmem:[%s3 + $0xe0] sm:$0xff]
    %v1896 = vld [vmem:[%s3 + $0xe8] sm:$0xff]
    %v1897 = vld [vmem:[%s3 + $0xf0] sm:$0xff]
    %v1898 = vld [vmem:[%s3 + $0xf8] sm:$0xff]
    %v1899 = vld [vmem:[%s3 + $0x100] sm:$0xff]
    %v1900 = vld [vmem:[%s3 + $0x108] sm:$0xff]
    %v1901 = vld [vmem:[%s3 + $0x110] sm:$0xff]
    %v1902 = vld [vmem:[%s3 + $0x118] sm:$0xff]
    %v1903 = vld [vmem:[%s3 + $0x120] sm:$0xff]
    %v1904 = vld [vmem:[%s3 + $0x128] sm:$0xff]
    %v1905 = vld [vmem:[%s3 + $0x130] sm:$0xff]
    %v1906 = vld [vmem:[%s3 + $0x138] sm:$0xff]
    %v1907 = vld [vmem:[%s3 + $0x140] sm:$0xff]
    %v1908 = vld [vmem:[%s3 + $0x148] sm:$0xff]
    %v1909 = vld [vmem:[%s3 + $0x150] sm:$0xff]
    %v1910 = vld [vmem:[%s3 + $0x158] sm:$0xff]
    %v1911 = vld [vmem:[%s3 + $0x160] sm:$0xff]
    %v1912 = vld [vmem:[%s3 + $0x168] sm:$0xff]
    %v1913 = vld [vmem:[%s3 + $0x170] sm:$0xff]
    %v1914 = vld [vmem:[%s3 + $0x178] sm:$0xff]
    %v1915 = vld [vmem:[%s3 + $0x180] sm:$0xff]
    %v1916 = vld [vmem:[%s3 + $0x188] sm:$0xff]
    %v1917 = vld [vmem:[%s3 + $0x190] sm:$0xff]
    %v1918 = vld [vmem:[%s3 + $0x198] sm:$0xff]
    %v1919 = vld [vmem:[%s3 + $0x1a0] sm:$0xff]
    %v1920 = vld [vmem:[%s3 + $0x1a8] sm:$0xff]
    %v1921 = vld [vmem:[%s3 + $0x1b0] sm:$0xff]
    %v1922 = vld [vmem:[%s3 + $0x1b8] sm:$0xff]
    %v1923 = vld [vmem:[%s3 + $0x1c0] sm:$0xff]
    %v1924 = vld [vmem:[%s3 + $0x1c8] sm:$0xff]
    %v1925 = vld [vmem:[%s3 + $0x1d0] sm:$0xff]
    %v1926 = vld [vmem:[%s3 + $0x1d8] sm:$0xff]
    %v1927 = vld [vmem:[%s3 + $0x1e0] sm:$0xff]
    %v1928 = vld [vmem:[%s3 + $0x1e8] sm:$0xff]
    %v1929 = vld [vmem:[%s3 + $0x1f0] sm:$0xff]
    %v1930 = vld [vmem:[%s3 + $0x1f8] sm:$0xff]
    %v1931 = vld [vmem:[%s4] sm:$0x3]
    %v1933 = vlaneseq
    %v1934 = vshrl.u32 %v1933, 7
    %v1935 = vsub.s32 0, %v1934
    %v1936 = vrot.slane %v1931, %v1935
    %v1937 = vlaneseq
    %v1938 = vshrl.u32 %v1937, 7
    %v1939 = vsub.s32 1, %v1938
    %v1940 = vrot.slane %v1931, %v1939
    %v2007 = vunpack.c.l.b16 %v1867
    %v2008 = vunpack.c.h.b16 %v1867
    %v2009 = vunpack.c.l.b16 %v1868
    %v2010 = vunpack.c.h.b16 %v1868
    %v2011 = vunpack.c.l.b16 %v1869
    %v2012 = vunpack.c.h.b16 %v1869
    %v2013 = vunpack.c.l.b16 %v1870
    %v2014 = vunpack.c.h.b16 %v1870
    %v2015 = vunpack.c.l.b16 %v1871
    %v2016 = vunpack.c.h.b16 %v1871
    %v2017 = vunpack.c.l.b16 %v1872
    %v2018 = vunpack.c.h.b16 %v1872
    %v2019 = vunpack.c.l.b16 %v1873
    %v2020 = vunpack.c.h.b16 %v1873
    %v2021 = vunpack.c.l.b16 %v1874
    %v2022 = vunpack.c.h.b16 %v1874
    %v2023 = vunpack.c.l.b16 %v1875
    %v2024 = vunpack.c.h.b16 %v1875
    %v2025 = vunpack.c.l.b16 %v1876
    %v2026 = vunpack.c.h.b16 %v1876
    %v2027 = vunpack.c.l.b16 %v1877
    %v2028 = vunpack.c.h.b16 %v1877
    %v2029 = vunpack.c.l.b16 %v1878
    %v2030 = vunpack.c.h.b16 %v1878
    %v2031 = vunpack.c.l.b16 %v1879
    %v2032 = vunpack.c.h.b16 %v1879
    %v2033 = vunpack.c.l.b16 %v1880
    %v2034 = vunpack.c.h.b16 %v1880
    %v2035 = vunpack.c.l.b16 %v1881
    %v2036 = vunpack.c.h.b16 %v1881
    %v2037 = vunpack.c.l.b16 %v1882
    %v2038 = vunpack.c.h.b16 %v1882
    %v2039 = vunpack.c.l.b16 %v1883
    %v2040 = vunpack.c.h.b16 %v1883
    %v2041 = vunpack.c.l.b16 %v1884
    %v2042 = vunpack.c.h.b16 %v1884
    %v2043 = vunpack.c.l.b16 %v1885
    %v2044 = vunpack.c.h.b16 %v1885
    %v2045 = vunpack.c.l.b16 %v1886
    %v2046 = vunpack.c.h.b16 %v1886
    %v2047 = vunpack.c.l.b16 %v1887
    %v2048 = vunpack.c.h.b16 %v1887
    %v2049 = vunpack.c.l.b16 %v1888
    %v2050 = vunpack.c.h.b16 %v1888
    %v2051 = vunpack.c.l.b16 %v1889
    %v2052 = vunpack.c.h.b16 %v1889
    %v2053 = vunpack.c.l.b16 %v1890
    %v2054 = vunpack.c.h.b16 %v1890
    %v2055 = vunpack.c.l.b16 %v1891
    %v2056 = vunpack.c.h.b16 %v1891
    %v2057 = vunpack.c.l.b16 %v1892
    %v2058 = vunpack.c.h.b16 %v1892
    %v2059 = vunpack.c.l.b16 %v1893
    %v2060 = vunpack.c.h.b16 %v1893
    %v2061 = vunpack.c.l.b16 %v1894
    %v2062 = vunpack.c.h.b16 %v1894
    %v2063 = vunpack.c.l.b16 %v1895
    %v2064 = vunpack.c.h.b16 %v1895
    %v2065 = vunpack.c.l.b16 %v1896
    %v2066 = vunpack.c.h.b16 %v1896
    %v2067 = vunpack.c.l.b16 %v1897
    %v2068 = vunpack.c.h.b16 %v1897
    %v2069 = vunpack.c.l.b16 %v1898
    %v2070 = vunpack.c.h.b16 %v1898
    %v2071 = vunpack.c.l.b16 %v1899
    %v2072 = vunpack.c.h.b16 %v1899
    %v2073 = vunpack.c.l.b16 %v1900
    %v2074 = vunpack.c.h.b16 %v1900
    %v2075 = vunpack.c.l.b16 %v1901
    %v2076 = vunpack.c.h.b16 %v1901
    %v2077 = vunpack.c.l.b16 %v1902
    %v2078 = vunpack.c.h.b16 %v1902
    %v2079 = vunpack.c.l.b16 %v1903
    %v2080 = vunpack.c.h.b16 %v1903
    %v2081 = vunpack.c.l.b16 %v1904
    %v2082 = vunpack.c.h.b16 %v1904
    %v2083 = vunpack.c.l.b16 %v1905
    %v2084 = vunpack.c.h.b16 %v1905
    %v2085 = vunpack.c.l.b16 %v1906
    %v2086 = vunpack.c.h.b16 %v1906
    %v2087 = vunpack.c.l.b16 %v1907
    %v2088 = vunpack.c.h.b16 %v1907
    %v2089 = vunpack.c.l.b16 %v1908
    %v2090 = vunpack.c.h.b16 %v1908
    %v2091 = vunpack.c.l.b16 %v1909
    %v2092 = vunpack.c.h.b16 %v1909
    %v2093 = vunpack.c.l.b16 %v1910
    %v2094 = vunpack.c.h.b16 %v1910
    %v2095 = vunpack.c.l.b16 %v1911
    %v2096 = vunpack.c.h.b16 %v1911
    %v2097 = vunpack.c.l.b16 %v1912
    %v2098 = vunpack.c.h.b16 %v1912
    %v2099 = vunpack.c.l.b16 %v1913
    %v2100 = vunpack.c.h.b16 %v1913
    %v2101 = vunpack.c.l.b16 %v1914
    %v2102 = vunpack.c.h.b16 %v1914
    %v2103 = vunpack.c.l.b16 %v1915
    %v2104 = vunpack.c.h.b16 %v1915
    %v2105 = vunpack.c.l.b16 %v1916
    %v2106 = vunpack.c.h.b16 %v1916
    %v2107 = vunpack.c.l.b16 %v1917
    %v2108 = vunpack.c.h.b16 %v1917
    %v2109 = vunpack.c.l.b16 %v1918
    %v2110 = vunpack.c.h.b16 %v1918
    %v2111 = vunpack.c.l.b16 %v1919
    %v2112 = vunpack.c.h.b16 %v1919
    %v2113 = vunpack.c.l.b16 %v1920
    %v2114 = vunpack.c.h.b16 %v1920
    %v2115 = vunpack.c.l.b16 %v1921
    %v2116 = vunpack.c.h.b16 %v1921
    %v2117 = vunpack.c.l.b16 %v1922
    %v2118 = vunpack.c.h.b16 %v1922
    %v2119 = vunpack.c.l.b16 %v1923
    %v2120 = vunpack.c.h.b16 %v1923
    %v2121 = vunpack.c.l.b16 %v1924
    %v2122 = vunpack.c.h.b16 %v1924
    %v2123 = vunpack.c.l.b16 %v1925
    %v2124 = vunpack.c.h.b16 %v1925
    %v2125 = vunpack.c.l.b16 %v1926
    %v2126 = vunpack.c.h.b16 %v1926
    %v2127 = vunpack.c.l.b16 %v1927
    %v2128 = vunpack.c.h.b16 %v1927
    %v2129 = vunpack.c.l.b16 %v1928
    %v2130 = vunpack.c.h.b16 %v1928
    %v2131 = vunpack.c.l.b16 %v1929
    %v2132 = vunpack.c.h.b16 %v1929
    %v2133 = vunpack.c.l.b16 %v1930
    %v2134 = vunpack.c.h.b16 %v1930
    %v2135 = vpack.c.b16 %v2009, %v2007
    %v2136 = vpack.c.b16 %v2010, %v2008
    %v2137 = vpack.c.b16 %v2013, %v2011
    %v2138 = vpack.c.b16 %v2014, %v2012
    %v2139 = vpack.c.b16 %v2017, %v2015
    %v2140 = vpack.c.b16 %v2018, %v2016
    %v2141 = vpack.c.b16 %v2021, %v2019
    %v2142 = vpack.c.b16 %v2022, %v2020
    %v2143 = vpack.c.b16 %v2025, %v2023
    %v2144 = vpack.c.b16 %v2026, %v2024
    %v2145 = vpack.c.b16 %v2029, %v2027
    %v2146 = vpack.c.b16 %v2030, %v2028
    %v2147 = vpack.c.b16 %v2033, %v2031
    %v2148 = vpack.c.b16 %v2034, %v2032
    %v2149 = vpack.c.b16 %v2037, %v2035
    %v2150 = vpack.c.b16 %v2038, %v2036
    %v2151 = vpack.c.b16 %v2041, %v2039
    %v2152 = vpack.c.b16 %v2042, %v2040
    %v2153 = vpack.c.b16 %v2045, %v2043
    %v2154 = vpack.c.b16 %v2046, %v2044
    %v2155 = vpack.c.b16 %v2049, %v2047
    %v2156 = vpack.c.b16 %v2050, %v2048
    %v2157 = vpack.c.b16 %v2053, %v2051
    %v2158 = vpack.c.b16 %v2054, %v2052
    %v2159 = vpack.c.b16 %v2057, %v2055
    %v2160 = vpack.c.b16 %v2058, %v2056
    %v2161 = vpack.c.b16 %v2061, %v2059
    %v2162 = vpack.c.b16 %v2062, %v2060
    %v2163 = vpack.c.b16 %v2065, %v2063
    %v2164 = vpack.c.b16 %v2066, %v2064
    %v2165 = vpack.c.b16 %v2069, %v2067
    %v2166 = vpack.c.b16 %v2070, %v2068
    %v2167 = vpack.c.b16 %v2073, %v2071
    %v2168 = vpack.c.b16 %v2074, %v2072
    %v2169 = vpack.c.b16 %v2077, %v2075
    %v2170 = vpack.c.b16 %v2078, %v2076
    %v2171 = vpack.c.b16 %v2081, %v2079
    %v2172 = vpack.c.b16 %v2082, %v2080
    %v2173 = vpack.c.b16 %v2085, %v2083
    %v2174 = vpack.c.b16 %v2086, %v2084
    %v2175 = vpack.c.b16 %v2089, %v2087
    %v2176 = vpack.c.b16 %v2090, %v2088
    %v2177 = vpack.c.b16 %v2093, %v2091
    %v2178 = vpack.c.b16 %v2094, %v2092
    %v2179 = vpack.c.b16 %v2097, %v2095
    %v2180 = vpack.c.b16 %v2098, %v2096
    %v2181 = vpack.c.b16 %v2101, %v2099
    %v2182 = vpack.c.b16 %v2102, %v2100
    %v2183 = vpack.c.b16 %v2105, %v2103
    %v2184 = vpack.c.b16 %v2106, %v2104
    %v2185 = vpack.c.b16 %v2109, %v2107
    %v2186 = vpack.c.b16 %v2110, %v2108
    %v2187 = vpack.c.b16 %v2113, %v2111
    %v2188 = vpack.c.b16 %v2114, %v2112
    %v2189 = vpack.c.b16 %v2117, %v2115
    %v2190 = vpack.c.b16 %v2118, %v2116
    %v2191 = vpack.c.b16 %v2121, %v2119
    %v2192 = vpack.c.b16 %v2122, %v2120
    %v2193 = vpack.c.b16 %v2125, %v2123
    %v2194 = vpack.c.b16 %v2126, %v2124
    %v2195 = vpack.c.b16 %v2129, %v2127
    %v2196 = vpack.c.b16 %v2130, %v2128
    %v2197 = vpack.c.b16 %v2133, %v2131
    %v2198 = vpack.c.b16 %v2134, %v2132
    %2263 = vmatprep.subr.bf16.mxu0 %v2136
    %2264 = vmatpush1.bf16.msra.mxu0 %v2135
    %2265 = vmatprep.subr.bf16.mxu0 %v2138
    %2266 = vmatpush1.bf16.msra.mxu0 %v2137
    %2267 = vmatprep.subr.bf16.mxu0 %v2140
    %2268 = vmatpush1.bf16.msra.mxu0 %v2139
    %2269 = vmatprep.subr.bf16.mxu0 %v2142
    %2270 = vmatpush1.bf16.msra.mxu0 %v2141
    %2271 = vmatprep.subr.bf16.mxu0 %v2144
    %2272 = vmatpush1.bf16.msra.mxu0 %v2143
    %2273 = vmatprep.subr.bf16.mxu0 %v2146
    %2274 = vmatpush1.bf16.msra.mxu0 %v2145
    %2275 = vmatprep.subr.bf16.mxu0 %v2148
    %2276 = vmatpush1.bf16.msra.mxu0 %v2147
    %2277 = vmatprep.subr.bf16.mxu0 %v2150
    %2278 = vmatpush1.bf16.msra.mxu0 %v2149
    %2279 = vmatprep.subr.bf16.mxu0 %v2152
    %2280 = vmatpush1.bf16.msra.mxu0 %v2151
    %2281 = vmatprep.subr.bf16.mxu0 %v2154
    %2282 = vmatpush1.bf16.msra.mxu0 %v2153
    %2283 = vmatprep.subr.bf16.mxu0 %v2156
    %2284 = vmatpush1.bf16.msra.mxu0 %v2155
    %2285 = vmatprep.subr.bf16.mxu0 %v2158
    %2286 = vmatpush1.bf16.msra.mxu0 %v2157
    %2287 = vmatprep.subr.bf16.mxu0 %v2160
    %2288 = vmatpush1.bf16.msra.mxu0 %v2159
    %2289 = vmatprep.subr.bf16.mxu0 %v2162
    %2290 = vmatpush1.bf16.msra.mxu0 %v2161
    %2291 = vmatprep.subr.bf16.mxu0 %v2164
    %2292 = vmatpush1.bf16.msra.mxu0 %v2163
    %2293 = vmatprep.subr.bf16.mxu0 %v2166
    %2294 = vmatpush1.bf16.msra.mxu0 %v2165
    %2295 = vmatprep.mubr.bf16.mxu0 %v1856
    %2296 = vmatmul.mubr.bf16.gmra.mrb[0].mxu0 %v1855
    %v2297 = vpop.f32.mrb[0].mxu0
    %v2298 = vadd.f32 %v1936, %v2297
    %v2299 = vpop.f32.mrb[0].mxu0
    %v2300 = vadd.f32 %v1940, %v2299
    %v2301 = vpop.f32.mrb[0].mxu0
    %v2302 = vadd.f32 %v1936, %v2301
    %v2303 = vpop.f32.mrb[0].mxu0
    %v2304 = vadd.f32 %v1940, %v2303
    %2305 = vmatprep.mubr.bf16.mxu0 %v1860
    %2306 = vmatmul.mubr.bf16.gmra.mrb[0].mxu0 %v1859
    %v2307 = vpop.f32.mrb[0].mxu0
    %v2308 = vadd.f32 %v1936, %v2307
    %v2309 = vpop.f32.mrb[0].mxu0
    %v2310 = vadd.f32 %v1940, %v2309
    %v2311 = vpop.f32.mrb[0].mxu0
    %v2312 = vadd.f32 %v1936, %v2311
    %v2313 = vpop.f32.mrb[0].mxu0
    %v2314 = vadd.f32 %v1940, %v2313
    %2315 = vmatprep.mubr.bf16.mxu0 %v1864
    %2316 = vmatmul.mubr.bf16.gmra.mrb[0].mxu0 %v1863
    %v2317 = vpop.f32.mrb[0].mxu0
    %v2318 = vadd.f32 %v1936, %v2317
    %v2319 = vpop.f32.mrb[0].mxu0
    %v2320 = vadd.f32 %v1940, %v2319
    %v2321 = vpop.f32.mrb[0].mxu0
    %v2322 = vpop.f32.mrb[0].mxu0
    %2323 = vdwg.mxu0
    %2324 = vmatprep.subr.bf16.mxu0 %v2168
    %2325 = vmatpush1.bf16.msra.mxu0 %v2167
    %2326 = vmatprep.subr.bf16.mxu0 %v2170
    %2327 = vmatpush1.bf16.msra.mxu0 %v2169
    %2328 = vmatprep.subr.bf16.mxu0 %v2172
    %2329 = vmatpush1.bf16.msra.mxu0 %v2171
    %2330 = vmatprep.subr.bf16.mxu0 %v2174
    %2331 = vmatpush1.bf16.msra.mxu0 %v2173
    %2332 = vmatprep.subr.bf16.mxu0 %v2176
    %2333 = vmatpush1.bf16.msra.mxu0 %v2175
    %2334 = vmatprep.subr.bf16.mxu0 %v2178
    %2335 = vmatpush1.bf16.msra.mxu0 %v2177
    %2336 = vmatprep.subr.bf16.mxu0 %v2180
    %2337 = vmatpush1.bf16.msra.mxu0 %v2179
    %2338 = vmatprep.subr.bf16.mxu0 %v2182
    %2339 = vmatpush1.bf16.msra.mxu0 %v2181
    %2340 = vmatprep.subr.bf16.mxu0 %v2184
    %2341 = vmatpush1.bf16.msra.mxu0 %v2183
    %2342 = vmatprep.subr.bf16.mxu0 %v2186
    %2343 = vmatpush1.bf16.msra.mxu0 %v2185
    %2344 = vmatprep.subr.bf16.mxu0 %v2188
    %2345 = vmatpush1.bf16.msra.mxu0 %v2187
    %2346 = vmatprep.subr.bf16.mxu0 %v2190
    %2347 = vmatpush1.bf16.msra.mxu0 %v2189
    %2348 = vmatprep.subr.bf16.mxu0 %v2192
    %2349 = vmatpush1.bf16.msra.mxu0 %v2191
    %2350 = vmatprep.subr.bf16.mxu0 %v2194
    %2351 = vmatpush1.bf16.msra.mxu0 %v2193
    %2352 = vmatprep.subr.bf16.mxu0 %v2196
    %2353 = vmatpush1.bf16.msra.mxu0 %v2195
    %2354 = vmatprep.subr.bf16.mxu0 %v2198
    %2355 = vmatpush1.bf16.msra.mxu0 %v2197
    %2356 = vmatprep.mubr.bf16.mxu0 %v1858
    %2357 = vmatmul.mubr.bf16.gmra.mrb[0].mxu0 %v1857
    %v2358 = vpop.f32.mrb[0].mxu0
    %v2359 = vadd.f32 %v2298, %v2358
    %v2360 = vpop.f32.mrb[0].mxu0
    %v2361 = vadd.f32 %v2300, %v2360
    %v2362 = vpop.f32.mrb[0].mxu0
    %v2363 = vadd.f32 %v2302, %v2362
    %v2364 = vpop.f32.mrb[0].mxu0
    %v2365 = vadd.f32 %v2304, %v2364
    %2366 = vmatprep.mubr.bf16.mxu0 %v1862
    %2367 = vmatmul.mubr.bf16.gmra.mrb[0].mxu0 %v1861
    %v2368 = vpop.f32.mrb[0].mxu0
    %v2369 = vadd.f32 %v2308, %v2368
    %v2370 = vpop.f32.mrb[0].mxu0
    %v2371 = vadd.f32 %v2310, %v2370
    %v2372 = vpop.f32.mrb[0].mxu0
    %v2373 = vadd.f32 %v2312, %v2372
    %v2374 = vpop.f32.mrb[0].mxu0
    %v2375 = vadd.f32 %v2314, %v2374
    %2376 = vmatprep.mubr.bf16.mxu0 %v1866
    %2377 = vmatmul.mubr.bf16.gmra.mrb[0].mxu0 %v1865
    %v2378 = vpop.f32.mrb[0].mxu0
    %v2379 = vadd.f32 %v2318, %v2378
    %v2380 = vpop.f32.mrb[0].mxu0
    %v2381 = vadd.f32 %v2320, %v2380
    %v2382 = vpop.f32.mrb[0].mxu0
    %v2383 = vpop.f32.mrb[0].mxu0
    %2384 = vdwg.mxu0
    %vm2385 = vcmp.gt.f32.partialorder %v2359, 0.0
    %vm2386 = vcmp.gt.f32.partialorder %v2361, 0.0
    %vm2387 = vcmp.gt.f32.partialorder %v2363, 0.0
    %vm2388 = vcmp.gt.f32.partialorder %v2365, 0.0
    %vm2389 = vcmp.gt.f32.partialorder %v2369, 0.0
    %vm2390 = vcmp.gt.f32.partialorder %v2371, 0.0
    %vm2391 = vcmp.gt.f32.partialorder %v2373, 0.0
    %vm2392 = vcmp.gt.f32.partialorder %v2375, 0.0
    %vm2393 = vcmp.gt.f32.partialorder %v2379, 0.0
    %vm2394 = vcmp.gt.f32.partialorder %v2381, 0.0
    %v2395 = vmul.f32 %v2359, 0.2
    %v2396 = vmul.f32 %v2361, 0.2
    %v2397 = vmul.f32 %v2363, 0.2
    %v2398 = vmul.f32 %v2365, 0.2
    %v2399 = vmul.f32 %v2369, 0.2
    %v2400 = vmul.f32 %v2371, 0.2
    %v2401 = vmul.f32 %v2373, 0.2
    %v2402 = vmul.f32 %v2375, 0.2
    %v2403 = vmul.f32 %v2379, 0.2
    %v2404 = vmul.f32 %v2381, 0.2
    %v2405 = vsel %vm2385, %v2359, %v2395
    %v2406 = vsel %vm2386, %v2361, %v2396
    %v2407 = vsel %vm2387, %v2363, %v2397
    %v2408 = vsel %vm2388, %v2365, %v2398
    %v2409 = vsel %vm2389, %v2369, %v2399
    %v2410 = vsel %vm2390, %v2371, %v2400
    %v2411 = vsel %vm2391, %v2373, %v2401
    %v2412 = vsel %vm2392, %v2375, %v2402
    %v2413 = vsel %vm2393, %v2379, %v2403
    %v2414 = vsel %vm2394, %v2381, %v2404
    %v2415 = vld [vmem:[%s5] sm:$0x3]
    %v2417 = vlaneseq
    %v2418 = vshrl.u32 %v2417, 7
    %v2419 = vsub.s32 0, %v2418
    %v2420 = vrot.slane %v2415, %v2419
    %v2421 = vlaneseq
    %v2422 = vshrl.u32 %v2421, 7
    %v2423 = vsub.s32 1, %v2422
    %v2424 = vrot.slane %v2415, %v2423
    %v2427 = vmul.f32 %v2405, %v2420
    %v2428 = vmul.f32 %v2406, %v2424
    %v2429 = vmul.f32 %v2407, %v2420
    %v2430 = vmul.f32 %v2408, %v2424
    %v2431 = vmul.f32 %v2409, %v2420
    %v2432 = vmul.f32 %v2410, %v2424
    %v2433 = vmul.f32 %v2411, %v2420
    %v2434 = vmul.f32 %v2412, %v2424
    %v2435 = vmul.f32 %v2413, %v2420
    %v2436 = vmul.f32 %v2414, %v2424
    %v2437 = vadd.f32 %v2427, %v2428
    %2438 = vadd.xlane.f32.xlu0 %v2437
    %v2439 = vpop.xlane.xlu0 %2438
    %v2440 = vadd.f32 %v2429, %v2430
    %2441 = vadd.xlane.f32.xlu0 %v2440
    %v2442 = vpop.xlane.xlu0 %2441
    %v2443 = vadd.f32 %v2431, %v2432
    %2444 = vadd.xlane.f32.xlu0 %v2443
    %v2445 = vpop.xlane.xlu0 %2444
    %v2446 = vadd.f32 %v2433, %v2434
    %2447 = vadd.xlane.f32.xlu0 %v2446
    %v2448 = vpop.xlane.xlu0 %2447
    %v2449 = vadd.f32 %v2435, %v2436
    %2450 = vadd.xlane.f32.xlu0 %v2449
    %v2451 = vpop.xlane.xlu0 %2450
    %v2452 = vld [vmem:[#allocation2] sm:$0x1]
    %v2454 = vlaneseq
    %v2455 = vshrl.u32 %v2454, 7
    %v2456 = vsub.s32 0, %v2455
    %v2457 = vrot.slane %v2452, %v2456
    %v2459 = vadd.f32 %v2439, %v2457
    %v2460 = vadd.f32 %v2442, %v2457
    %v2461 = vadd.f32 %v2445, %v2457
    %v2462 = vadd.f32 %v2448, %v2457
    %v2463 = vadd.f32 %v2451, %v2457
    %v2464 = vsub.f32 0.0, %v2459
    %v2465 = vsub.f32 0.0, %v2460
    %v2466 = vsub.f32 0.0, %v2461
    %v2467 = vsub.f32 0.0, %v2462
    %v2468 = vsub.f32 0.0, %v2463
    %v2469 = vmul.f32 %v2464, 1.442695
    %v2470 = vpow.pop %v2469
    %v2471 = vmul.f32 %v2465, 1.442695
    %v2472 = vpow.pop %v2471
    %v2473 = vmul.f32 %v2466, 1.442695
    %v2474 = vpow.pop %v2473
    %v2475 = vmul.f32 %v2467, 1.442695
    %v2476 = vpow.pop %v2475
    %v2477 = vmul.f32 %v2468, 1.442695
    %v2478 = vpow.pop %v2477
    %v2479 = vadd.f32 %v2470, 1.0
    %v2480 = vadd.f32 %v2472, 1.0
    %v2481 = vadd.f32 %v2474, 1.0
    %v2482 = vadd.f32 %v2476, 1.0
    %v2483 = vadd.f32 %v2478, 1.0
    %v2484 = vrcp.pop %v2479
    %v2485 = vmul.f32 1.0, %v2484
    %v2486 = vrcp.pop %v2480
    %v2487 = vmul.f32 1.0, %v2486
    %v2488 = vrcp.pop %v2481
    %v2489 = vmul.f32 1.0, %v2488
    %v2490 = vrcp.pop %v2482
    %v2491 = vmul.f32 1.0, %v2490
    %v2492 = vrcp.pop %v2483
    %v2493 = vmul.f32 1.0, %v2492
    %vm2494 = vcmask 7168
    %2495 = vst.msk [vmem:[%s7] sm:$0xff] %vm2494, %v2485
    %2496 = vst.msk [vmem:[%s7 + $0x8] sm:$0xff] %vm2494, %v2487
    %2497 = vst.msk [vmem:[%s7 + $0x10] sm:$0xff] %vm2494, %v2489
    %2498 = vst.msk [vmem:[%s7 + $0x18] sm:$0xff] %vm2494, %v2491
    %2499 = vst.msk [vmem:[%s7 + $0x20] sm:$0xff] %vm2494, %v2493
    // Predicated region
    $region34: #{discriminator_forward.1} parent=1 // pred_check
      _
    $region35: #{discriminator_forward.1} parent=1 // pred_check_branch
      %2501 = sbr.rel (0) target = $region37
    $region36: #{discriminator_forward.1} parent=1 // pred_region
      _
    $region37: #{discriminator_forward.1} parent=1 // pred_fallthru
      _
    // Predicated region
    $region38: #{discriminator_forward.1} parent=1 // pred_check
      _
    $region39: #{discriminator_forward.1} parent=1 // pred_check_branch
      %2503 = sbr.rel (0) target = $region41
    $region40: #{discriminator_forward.1} parent=1 // pred_region
      _
    $region41: #{discriminator_forward.1} parent=1 // pred_fallthru
      _
    %2504 = vsyncpa [#allocation4], 1

</llo_original>
